<compile_context>
chip_gen: v5e
topology: v5e:2x2
jax: 0.10.0
libtpu: 0.0.40
codegen_flags: <defaults>
</compile_context>

<pallas_src>
import functools

import jax
import jax.numpy as jnp
from jax.experimental import pallas as pl
from jax.experimental.pallas import tpu as pltpu


def _conv2d_kernel(x_ref, w_ref, o_ref, *, nb, kh, kw, w_in, c_in, c_out, hw):
    """Direct conv as a VPU broadcast-FMA chain over lane-dense spatial vectors.

    x_ref : (NB, C_in,  H*W)      VMEM  (NCHW with spatial flattened, lane-dense)
    w_ref : (C_out, KH*KW*C_in)   VMEM  (k = (i*KW + j)*C_in + ci)
    o_ref : (NB, C_out, H*W)      VMEM  (valid at p = y*W + x with y<H_out, x<W_out)
    """
    wmat = w_ref[...].astype(jnp.float32)             # loaded once, ~1 vreg
    for n in range(nb):                                # small static unroll
        xn = x_ref[n].astype(jnp.float32)              # (C_in, H*W)
        acc = jnp.zeros((c_out, hw), jnp.float32)      # lane-dense acc (~2 vregs)
        for i in range(kh):
            for j in range(kw):
                s = i * w_in + j
                # xs[:, p] == xn[:, (p + s) mod HW]; wrap-around only hits
                # positions that are discarded by the final valid-window slice.
                xs = xn if s == 0 else pltpu.roll(xn, shift=hw - s, axis=1)
                for ci in range(c_in):
                    k = (i * kw + j) * c_in + ci
                    # (C_out,1) x (1,HW) outer-product accumulate: pure VPU.
                    acc = acc + wmat[:, k:k + 1] * xs[ci:ci + 1, :]
        o_ref[n] = acc.astype(o_ref.dtype)


def conv2d_synapse_conn_forward(x_nchw, weight_oihw, *, stride=1, padding=0,
                                dilation=1, groups=1):
    """Equivalent of Conv2dSynapseConn.forward (step_mode='s', bias=False).

    x_nchw      : (N, C_in, H, W)          -- PyTorch NCHW
    weight_oihw : (C_out, C_in, KH, KW)    -- PyTorch OIHW
    returns     : (N, C_out, H_out, W_out) -- PyTorch NCHW
    """
    assert stride == 1 and dilation == 1 and groups == 1, (
        "only stride=1, dilation=1, groups=1 (module defaults) are implemented")
    # TODO(synk): bias=True, stride>1, dilation>1, groups>1, non-'zeros'
    # padding_mode and the wmin/wmax clamp utility are not implemented
    # (module defaults are used).

    n, c_in, h, w = x_nchw.shape
    c_out, c_in_w, kh, kw = weight_oihw.shape
    assert c_in == c_in_w

    if padding:
        x_nchw = jnp.pad(
            x_nchw, ((0, 0), (0, 0), (padding, padding), (padding, padding)))
        h += 2 * padding
        w += 2 * padding

    h_out = h - kh + 1
    w_out = w - kw + 1
    hw = h * w

    # Free reshape (merges contiguous minor dims): no transpose, no extra HBM pass.
    x_flat = x_nchw.reshape(n, c_in, hw)
    # Tiny one-time weight re-layout (288 floats): (C_out,C_in,KH,KW) -> (C_out, KH*KW*C_in).
    w_mat = jnp.transpose(weight_oihw, (0, 2, 3, 1)).reshape(c_out, kh * kw * c_in)

    # Batch-block the grid: biggest divisor of N (<=8) whose block stays well
    # under the VMEM budget (conservative for v7x's 64 MiB physical VMEM).
    bytes_per_image = (c_in + c_out) * hw * 4
    nb = 1
    for cand in range(1, min(n, 8) + 1):
        if n % cand == 0 and cand * bytes_per_image <= (2 << 20):
            nb = cand
    grid = (n // nb,)

    kernel = functools.partial(
        _conv2d_kernel, nb=nb, kh=kh, kw=kw, w_in=w,
        c_in=c_in, c_out=c_out, hw=hw)

    out_flat = pl.pallas_call(
        kernel,
        out_shape=jax.ShapeDtypeStruct((n, c_out, hw), x_nchw.dtype),
        grid=grid,
        in_specs=[
            pl.BlockSpec((nb, c_in, hw), lambda b: (b, 0, 0)),
            pl.BlockSpec((c_out, kh * kw * c_in), lambda b: (0, 0)),
        ],
        out_specs=pl.BlockSpec((nb, c_out, hw), lambda b: (b, 0, 0)),
        compiler_params=pltpu.CompilerParams(
            dimension_semantics=("parallel",),
            vmem_limit_bytes=32 * 1024 * 1024),
    )(x_flat, w_mat)

    # Layout plumbing only: drop rows y >= H_out and columns x >= W_out.
    return out_flat.reshape(n, c_out, h, w)[:, :, :h_out, :w_out]


if __name__ == "__main__":
    # Module config: Conv2dSynapseConn(in_channels=4, out_channels=8,
    #                                  kernel_size=3, bias=False)  [defaults]
    N, C_IN, H, W = 2, 4, 16, 16
    C_OUT, KH, KW = 8, 3, 3

    key = jax.random.PRNGKey(0)
    kx, kw_key = jax.random.split(key)

    x = jax.random.normal(kx, (N, C_IN, H, W), dtype=jnp.float32)

    # Deterministic nn.Conv2d-style init: U(-1/sqrt(fan_in), 1/sqrt(fan_in)).
    fan_in = C_IN * KH * KW
    bound = 1.0 / (fan_in ** 0.5)
    weight = jax.random.uniform(
        kw_key, (C_OUT, C_IN, KH, KW), dtype=jnp.float32,
        minval=-bound, maxval=bound)

    y = conv2d_synapse_conn_forward(x, weight, padding=0)
    y = jax.block_until_ready(y)

    # Reference check against XLA conv (same semantics as nn.Conv2d forward).
    y_ref = jax.lax.conv_general_dilated(
        x, weight, window_strides=(1, 1), padding="VALID",
        dimension_numbers=("NCHW", "OIHW", "NCHW"))
    assert y.shape == (N, C_OUT, H - KH + 1, W - KW + 1)
    assert jnp.allclose(y, y_ref, atol=1e-4, rtol=1e-4), (
        float(jnp.max(jnp.abs(y - y_ref))))

    print("KERNEL_OK")
</pallas_src>

<mosaic_0001>
module attributes {stable_mosaic.version = 11 : i64} {
  func.func @_conv2d_kernel(%arg0: i32, %arg1: memref<2x4x256xf32, #tpu.memory_space<vmem>>, %arg2: memref<8x36xf32, #tpu.memory_space<vmem>>, %arg3: memref<2x8x256xf32, #tpu.memory_space<vmem>>) attributes {dimension_semantics = [#tpu.dimension_semantics<parallel>], iteration_bounds = array<i64: 1>, scalar_prefetch = 0 : i64, scratch_operands = 0 : i64, tpu.core_type = #tpu.core_type<tc>, window_params = [{transform_indices = @transform_0, window_bounds = array<i64: 2, 4, 256>}, {pipeline_mode = #tpu.pipeline_mode<synchronous>, transform_indices = @transform_1, window_bounds = array<i64: 8, 36>}, {transform_indices = @transform_2, window_bounds = array<i64: 2, 8, 256>}]} {
    %c0 = arith.constant 0 : index
    %c0_0 = arith.constant 0 : index
    %0 = vector.load %arg2[%c0, %c0_0] : memref<8x36xf32, #tpu.memory_space<vmem>>, vector<8x36xf32>
    %c0_1 = arith.constant 0 : index
    %c0_2 = arith.constant 0 : index
    %c0_3 = arith.constant 0 : index
    %1 = vector.load %arg1[%c0_1, %c0_2, %c0_3] : memref<2x4x256xf32, #tpu.memory_space<vmem>>, vector<1x4x256xf32>
    %2 = vector.shape_cast %1 : vector<1x4x256xf32> to vector<4x256xf32>
    %cst = arith.constant 0.000000e+00 : f32
    %3 = vector.broadcast %cst : f32 to vector<8x256xf32>
    %4 = vector.extract_strided_slice %0 {offsets = [0, 0], sizes = [8, 1], strides = [1, 1]} : vector<8x36xf32> to vector<8x1xf32>
    %5 = vector.extract_strided_slice %2 {offsets = [0, 0], sizes = [1, 256], strides = [1, 1]} : vector<4x256xf32> to vector<1x256xf32>
    %6 = vector.broadcast %4 : vector<8x1xf32> to vector<8x256xf32>
    %7 = vector.broadcast %5 : vector<1x256xf32> to vector<8x256xf32>
    %8 = arith.mulf %6, %7 : vector<8x256xf32>
    %9 = arith.addf %3, %8 : vector<8x256xf32>
    %10 = vector.extract_strided_slice %0 {offsets = [0, 1], sizes = [8, 1], strides = [1, 1]} : vector<8x36xf32> to vector<8x1xf32>
    %11 = vector.extract_strided_slice %2 {offsets = [1, 0], sizes = [1, 256], strides = [1, 1]} : vector<4x256xf32> to vector<1x256xf32>
    %12 = vector.broadcast %10 : vector<8x1xf32> to vector<8x256xf32>
    %13 = vector.broadcast %11 : vector<1x256xf32> to vector<8x256xf32>
    %14 = arith.mulf %12, %13 : vector<8x256xf32>
    %15 = arith.addf %9, %14 : vector<8x256xf32>
    %16 = vector.extract_strided_slice %0 {offsets = [0, 2], sizes = [8, 1], strides = [1, 1]} : vector<8x36xf32> to vector<8x1xf32>
    %17 = vector.extract_strided_slice %2 {offsets = [2, 0], sizes = [1, 256], strides = [1, 1]} : vector<4x256xf32> to vector<1x256xf32>
    %18 = vector.broadcast %16 : vector<8x1xf32> to vector<8x256xf32>
    %19 = vector.broadcast %17 : vector<1x256xf32> to vector<8x256xf32>
    %20 = arith.mulf %18, %19 : vector<8x256xf32>
    %21 = arith.addf %15, %20 : vector<8x256xf32>
    %22 = vector.extract_strided_slice %0 {offsets = [0, 3], sizes = [8, 1], strides = [1, 1]} : vector<8x36xf32> to vector<8x1xf32>
    %23 = vector.extract_strided_slice %2 {offsets = [3, 0], sizes = [1, 256], strides = [1, 1]} : vector<4x256xf32> to vector<1x256xf32>
    %24 = vector.broadcast %22 : vector<8x1xf32> to vector<8x256xf32>
    %25 = vector.broadcast %23 : vector<1x256xf32> to vector<8x256xf32>
    %26 = arith.mulf %24, %25 : vector<8x256xf32>
    %27 = arith.addf %21, %26 : vector<8x256xf32>
    %c255_i32 = arith.constant 255 : i32
    %28 = tpu.dynamic_rotate %2 by %c255_i32 dim 1 : vector<4x256xf32>, i32 -> vector<4x256xf32>
    %29 = vector.extract_strided_slice %0 {offsets = [0, 4], sizes = [8, 1], strides = [1, 1]} : vector<8x36xf32> to vector<8x1xf32>
    %30 = vector.extract_strided_slice %28 {offsets = [0, 0], sizes = [1, 256], strides = [1, 1]} : vector<4x256xf32> to vector<1x256xf32>
    %31 = vector.broadcast %29 : vector<8x1xf32> to vector<8x256xf32>
    %32 = vector.broadcast %30 : vector<1x256xf32> to vector<8x256xf32>
    %33 = arith.mulf %31, %32 : vector<8x256xf32>
    %34 = arith.addf %27, %33 : vector<8x256xf32>
    %35 = vector.extract_strided_slice %0 {offsets = [0, 5], sizes = [8, 1], strides = [1, 1]} : vector<8x36xf32> to vector<8x1xf32>
    %36 = vector.extract_strided_slice %28 {offsets = [1, 0], sizes = [1, 256], strides = [1, 1]} : vector<4x256xf32> to vector<1x256xf32>
    %37 = vector.broadcast %35 : vector<8x1xf32> to vector<8x256xf32>
    %38 = vector.broadcast %36 : vector<1x256xf32> to vector<8x256xf32>
    %39 = arith.mulf %37, %38 : vector<8x256xf32>
    %40 = arith.addf %34, %39 : vector<8x256xf32>
    %41 = vector.extract_strided_slice %0 {offsets = [0, 6], sizes = [8, 1], strides = [1, 1]} : vector<8x36xf32> to vector<8x1xf32>
    %42 = vector.extract_strided_slice %28 {offsets = [2, 0], sizes = [1, 256], strides = [1, 1]} : vector<4x256xf32> to vector<1x256xf32>
    %43 = vector.broadcast %41 : vector<8x1xf32> to vector<8x256xf32>
    %44 = vector.broadcast %42 : vector<1x256xf32> to vector<8x256xf32>
    %45 = arith.mulf %43, %44 : vector<8x256xf32>
    %46 = arith.addf %40, %45 : vector<8x256xf32>
    %47 = vector.extract_strided_slice %0 {offsets = [0, 7], sizes = [8, 1], strides = [1, 1]} : vector<8x36xf32> to vector<8x1xf32>
    %48 = vector.extract_strided_slice %28 {offsets = [3, 0], sizes = [1, 256], strides = [1, 1]} : vector<4x256xf32> to vector<1x256xf32>
    %49 = vector.broadcast %47 : vector<8x1xf32> to vector<8x256xf32>
    %50 = vector.broadcast %48 : vector<1x256xf32> to vector<8x256xf32>
    %51 = arith.mulf %49, %50 : vector<8x256xf32>
    %52 = arith.addf %46, %51 : vector<8x256xf32>
    %c254_i32 = arith.constant 254 : i32
    %53 = tpu.dynamic_rotate %2 by %c254_i32 dim 1 : vector<4x256xf32>, i32 -> vector<4x256xf32>
    %54 = vector.extract_strided_slice %0 {offsets = [0, 8], sizes = [8, 1], strides = [1, 1]} : vector<8x36xf32> to vector<8x1xf32>
    %55 = vector.extract_strided_slice %53 {offsets = [0, 0], sizes = [1, 256], strides = [1, 1]} : vector<4x256xf32> to vector<1x256xf32>
    %56 = vector.broadcast %54 : vector<8x1xf32> to vector<8x256xf32>
    %57 = vector.broadcast %55 : vector<1x256xf32> to vector<8x256xf32>
    %58 = arith.mulf %56, %57 : vector<8x256xf32>
    %59 = arith.addf %52, %58 : vector<8x256xf32>
    %60 = vector.extract_strided_slice %0 {offsets = [0, 9], sizes = [8, 1], strides = [1, 1]} : vector<8x36xf32> to vector<8x1xf32>
    %61 = vector.extract_strided_slice %53 {offsets = [1, 0], sizes = [1, 256], strides = [1, 1]} : vector<4x256xf32> to vector<1x256xf32>
    %62 = vector.broadcast %60 : vector<8x1xf32> to vector<8x256xf32>
    %63 = vector.broadcast %61 : vector<1x256xf32> to vector<8x256xf32>
    %64 = arith.mulf %62, %63 : vector<8x256xf32>
    %65 = arith.addf %59, %64 : vector<8x256xf32>
    %66 = vector.extract_strided_slice %0 {offsets = [0, 10], sizes = [8, 1], strides = [1, 1]} : vector<8x36xf32> to vector<8x1xf32>
    %67 = vector.extract_strided_slice %53 {offsets = [2, 0], sizes = [1, 256], strides = [1, 1]} : vector<4x256xf32> to vector<1x256xf32>
    %68 = vector.broadcast %66 : vector<8x1xf32> to vector<8x256xf32>
    %69 = vector.broadcast %67 : vector<1x256xf32> to vector<8x256xf32>
    %70 = arith.mulf %68, %69 : vector<8x256xf32>
    %71 = arith.addf %65, %70 : vector<8x256xf32>
    %72 = vector.extract_strided_slice %0 {offsets = [0, 11], sizes = [8, 1], strides = [1, 1]} : vector<8x36xf32> to vector<8x1xf32>
    %73 = vector.extract_strided_slice %53 {offsets = [3, 0], sizes = [1, 256], strides = [1, 1]} : vector<4x256xf32> to vector<1x256xf32>
    %74 = vector.broadcast %72 : vector<8x1xf32> to vector<8x256xf32>
    %75 = vector.broadcast %73 : vector<1x256xf32> to vector<8x256xf32>
    %76 = arith.mulf %74, %75 : vector<8x256xf32>
    %77 = arith.addf %71, %76 : vector<8x256xf32>
    %c240_i32 = arith.constant 240 : i32
    %78 = tpu.dynamic_rotate %2 by %c240_i32 dim 1 : vector<4x256xf32>, i32 -> vector<4x256xf32>
    %79 = vector.extract_strided_slice %0 {offsets = [0, 12], sizes = [8, 1], strides = [1, 1]} : vector<8x36xf32> to vector<8x1xf32>
    %80 = vector.extract_strided_slice %78 {offsets = [0, 0], sizes = [1, 256], strides = [1, 1]} : vector<4x256xf32> to vector<1x256xf32>
    %81 = vector.broadcast %79 : vector<8x1xf32> to vector<8x256xf32>
    %82 = vector.broadcast %80 : vector<1x256xf32> to vector<8x256xf32>
    %83 = arith.mulf %81, %82 : vector<8x256xf32>
    %84 = arith.addf %77, %83 : vector<8x256xf32>
    %85 = vector.extract_strided_slice %0 {offsets = [0, 13], sizes = [8, 1], strides = [1, 1]} : vector<8x36xf32> to vector<8x1xf32>
    %86 = vector.extract_strided_slice %78 {offsets = [1, 0], sizes = [1, 256], strides = [1, 1]} : vector<4x256xf32> to vector<1x256xf32>
    %87 = vector.broadcast %85 : vector<8x1xf32> to vector<8x256xf32>
    %88 = vector.broadcast %86 : vector<1x256xf32> to vector<8x256xf32>
    %89 = arith.mulf %87, %88 : vector<8x256xf32>
    %90 = arith.addf %84, %89 : vector<8x256xf32>
    %91 = vector.extract_strided_slice %0 {offsets = [0, 14], sizes = [8, 1], strides = [1, 1]} : vector<8x36xf32> to vector<8x1xf32>
    %92 = vector.extract_strided_slice %78 {offsets = [2, 0], sizes = [1, 256], strides = [1, 1]} : vector<4x256xf32> to vector<1x256xf32>
    %93 = vector.broadcast %91 : vector<8x1xf32> to vector<8x256xf32>
    %94 = vector.broadcast %92 : vector<1x256xf32> to vector<8x256xf32>
    %95 = arith.mulf %93, %94 : vector<8x256xf32>
    %96 = arith.addf %90, %95 : vector<8x256xf32>
    %97 = vector.extract_strided_slice %0 {offsets = [0, 15], sizes = [8, 1], strides = [1, 1]} : vector<8x36xf32> to vector<8x1xf32>
    %98 = vector.extract_strided_slice %78 {offsets = [3, 0], sizes = [1, 256], strides = [1, 1]} : vector<4x256xf32> to vector<1x256xf32>
    %99 = vector.broadcast %97 : vector<8x1xf32> to vector<8x256xf32>
    %100 = vector.broadcast %98 : vector<1x256xf32> to vector<8x256xf32>
    %101 = arith.mulf %99, %100 : vector<8x256xf32>
    %102 = arith.addf %96, %101 : vector<8x256xf32>
    %c239_i32 = arith.constant 239 : i32
    %103 = tpu.dynamic_rotate %2 by %c239_i32 dim 1 : vector<4x256xf32>, i32 -> vector<4x256xf32>
    %104 = vector.extract_strided_slice %0 {offsets = [0, 16], sizes = [8, 1], strides = [1, 1]} : vector<8x36xf32> to vector<8x1xf32>
    %105 = vector.extract_strided_slice %103 {offsets = [0, 0], sizes = [1, 256], strides = [1, 1]} : vector<4x256xf32> to vector<1x256xf32>
    %106 = vector.broadcast %104 : vector<8x1xf32> to vector<8x256xf32>
    %107 = vector.broadcast %105 : vector<1x256xf32> to vector<8x256xf32>
    %108 = arith.mulf %106, %107 : vector<8x256xf32>
    %109 = arith.addf %102, %108 : vector<8x256xf32>
    %110 = vector.extract_strided_slice %0 {offsets = [0, 17], sizes = [8, 1], strides = [1, 1]} : vector<8x36xf32> to vector<8x1xf32>
    %111 = vector.extract_strided_slice %103 {offsets = [1, 0], sizes = [1, 256], strides = [1, 1]} : vector<4x256xf32> to vector<1x256xf32>
    %112 = vector.broadcast %110 : vector<8x1xf32> to vector<8x256xf32>
    %113 = vector.broadcast %111 : vector<1x256xf32> to vector<8x256xf32>
    %114 = arith.mulf %112, %113 : vector<8x256xf32>
    %115 = arith.addf %109, %114 : vector<8x256xf32>
    %116 = vector.extract_strided_slice %0 {offsets = [0, 18], sizes = [8, 1], strides = [1, 1]} : vector<8x36xf32> to vector<8x1xf32>
    %117 = vector.extract_strided_slice %103 {offsets = [2, 0], sizes = [1, 256], strides = [1, 1]} : vector<4x256xf32> to vector<1x256xf32>
    %118 = vector.broadcast %116 : vector<8x1xf32> to vector<8x256xf32>
    %119 = vector.broadcast %117 : vector<1x256xf32> to vector<8x256xf32>
    %120 = arith.mulf %118, %119 : vector<8x256xf32>
    %121 = arith.addf %115, %120 : vector<8x256xf32>
    %122 = vector.extract_strided_slice %0 {offsets = [0, 19], sizes = [8, 1], strides = [1, 1]} : vector<8x36xf32> to vector<8x1xf32>
    %123 = vector.extract_strided_slice %103 {offsets = [3, 0], sizes = [1, 256], strides = [1, 1]} : vector<4x256xf32> to vector<1x256xf32>
    %124 = vector.broadcast %122 : vector<8x1xf32> to vector<8x256xf32>
    %125 = vector.broadcast %123 : vector<1x256xf32> to vector<8x256xf32>
    %126 = arith.mulf %124, %125 : vector<8x256xf32>
    %127 = arith.addf %121, %126 : vector<8x256xf32>
    %c238_i32 = arith.constant 238 : i32
    %128 = tpu.dynamic_rotate %2 by %c238_i32 dim 1 : vector<4x256xf32>, i32 -> vector<4x256xf32>
    %129 = vector.extract_strided_slice %0 {offsets = [0, 20], sizes = [8, 1], strides = [1, 1]} : vector<8x36xf32> to vector<8x1xf32>
    %130 = vector.extract_strided_slice %128 {offsets = [0, 0], sizes = [1, 256], strides = [1, 1]} : vector<4x256xf32> to vector<1x256xf32>
    %131 = vector.broadcast %129 : vector<8x1xf32> to vector<8x256xf32>
    %132 = vector.broadcast %130 : vector<1x256xf32> to vector<8x256xf32>
    %133 = arith.mulf %131, %132 : vector<8x256xf32>
    %134 = arith.addf %127, %133 : vector<8x256xf32>
    %135 = vector.extract_strided_slice %0 {offsets = [0, 21], sizes = [8, 1], strides = [1, 1]} : vector<8x36xf32> to vector<8x1xf32>
    %136 = vector.extract_strided_slice %128 {offsets = [1, 0], sizes = [1, 256], strides = [1, 1]} : vector<4x256xf32> to vector<1x256xf32>
    %137 = vector.broadcast %135 : vector<8x1xf32> to vector<8x256xf32>
    %138 = vector.broadcast %136 : vector<1x256xf32> to vector<8x256xf32>
    %139 = arith.mulf %137, %138 : vector<8x256xf32>
    %140 = arith.addf %134, %139 : vector<8x256xf32>
    %141 = vector.extract_strided_slice %0 {offsets = [0, 22], sizes = [8, 1], strides = [1, 1]} : vector<8x36xf32> to vector<8x1xf32>
    %142 = vector.extract_strided_slice %128 {offsets = [2, 0], sizes = [1, 256], strides = [1, 1]} : vector<4x256xf32> to vector<1x256xf32>
    %143 = vector.broadcast %141 : vector<8x1xf32> to vector<8x256xf32>
    %144 = vector.broadcast %142 : vector<1x256xf32> to vector<8x256xf32>
    %145 = arith.mulf %143, %144 : vector<8x256xf32>
    %146 = arith.addf %140, %145 : vector<8x256xf32>
    %147 = vector.extract_strided_slice %0 {offsets = [0, 23], sizes = [8, 1], strides = [1, 1]} : vector<8x36xf32> to vector<8x1xf32>
    %148 = vector.extract_strided_slice %128 {offsets = [3, 0], sizes = [1, 256], strides = [1, 1]} : vector<4x256xf32> to vector<1x256xf32>
    %149 = vector.broadcast %147 : vector<8x1xf32> to vector<8x256xf32>
    %150 = vector.broadcast %148 : vector<1x256xf32> to vector<8x256xf32>
    %151 = arith.mulf %149, %150 : vector<8x256xf32>
    %152 = arith.addf %146, %151 : vector<8x256xf32>
    %c224_i32 = arith.constant 224 : i32
    %153 = tpu.dynamic_rotate %2 by %c224_i32 dim 1 : vector<4x256xf32>, i32 -> vector<4x256xf32>
    %154 = vector.extract_strided_slice %0 {offsets = [0, 24], sizes = [8, 1], strides = [1, 1]} : vector<8x36xf32> to vector<8x1xf32>
    %155 = vector.extract_strided_slice %153 {offsets = [0, 0], sizes = [1, 256], strides = [1, 1]} : vector<4x256xf32> to vector<1x256xf32>
    %156 = vector.broadcast %154 : vector<8x1xf32> to vector<8x256xf32>
    %157 = vector.broadcast %155 : vector<1x256xf32> to vector<8x256xf32>
    %158 = arith.mulf %156, %157 : vector<8x256xf32>
    %159 = arith.addf %152, %158 : vector<8x256xf32>
    %160 = vector.extract_strided_slice %0 {offsets = [0, 25], sizes = [8, 1], strides = [1, 1]} : vector<8x36xf32> to vector<8x1xf32>
    %161 = vector.extract_strided_slice %153 {offsets = [1, 0], sizes = [1, 256], strides = [1, 1]} : vector<4x256xf32> to vector<1x256xf32>
    %162 = vector.broadcast %160 : vector<8x1xf32> to vector<8x256xf32>
    %163 = vector.broadcast %161 : vector<1x256xf32> to vector<8x256xf32>
    %164 = arith.mulf %162, %163 : vector<8x256xf32>
    %165 = arith.addf %159, %164 : vector<8x256xf32>
    %166 = vector.extract_strided_slice %0 {offsets = [0, 26], sizes = [8, 1], strides = [1, 1]} : vector<8x36xf32> to vector<8x1xf32>
    %167 = vector.extract_strided_slice %153 {offsets = [2, 0], sizes = [1, 256], strides = [1, 1]} : vector<4x256xf32> to vector<1x256xf32>
    %168 = vector.broadcast %166 : vector<8x1xf32> to vector<8x256xf32>
    %169 = vector.broadcast %167 : vector<1x256xf32> to vector<8x256xf32>
    %170 = arith.mulf %168, %169 : vector<8x256xf32>
    %171 = arith.addf %165, %170 : vector<8x256xf32>
    %172 = vector.extract_strided_slice %0 {offsets = [0, 27], sizes = [8, 1], strides = [1, 1]} : vector<8x36xf32> to vector<8x1xf32>
    %173 = vector.extract_strided_slice %153 {offsets = [3, 0], sizes = [1, 256], strides = [1, 1]} : vector<4x256xf32> to vector<1x256xf32>
    %174 = vector.broadcast %172 : vector<8x1xf32> to vector<8x256xf32>
    %175 = vector.broadcast %173 : vector<1x256xf32> to vector<8x256xf32>
    %176 = arith.mulf %174, %175 : vector<8x256xf32>
    %177 = arith.addf %171, %176 : vector<8x256xf32>
    %c223_i32 = arith.constant 223 : i32
    %178 = tpu.dynamic_rotate %2 by %c223_i32 dim 1 : vector<4x256xf32>, i32 -> vector<4x256xf32>
    %179 = vector.extract_strided_slice %0 {offsets = [0, 28], sizes = [8, 1], strides = [1, 1]} : vector<8x36xf32> to vector<8x1xf32>
    %180 = vector.extract_strided_slice %178 {offsets = [0, 0], sizes = [1, 256], strides = [1, 1]} : vector<4x256xf32> to vector<1x256xf32>
    %181 = vector.broadcast %179 : vector<8x1xf32> to vector<8x256xf32>
    %182 = vector.broadcast %180 : vector<1x256xf32> to vector<8x256xf32>
    %183 = arith.mulf %181, %182 : vector<8x256xf32>
    %184 = arith.addf %177, %183 : vector<8x256xf32>
    %185 = vector.extract_strided_slice %0 {offsets = [0, 29], sizes = [8, 1], strides = [1, 1]} : vector<8x36xf32> to vector<8x1xf32>
    %186 = vector.extract_strided_slice %178 {offsets = [1, 0], sizes = [1, 256], strides = [1, 1]} : vector<4x256xf32> to vector<1x256xf32>
    %187 = vector.broadcast %185 : vector<8x1xf32> to vector<8x256xf32>
    %188 = vector.broadcast %186 : vector<1x256xf32> to vector<8x256xf32>
    %189 = arith.mulf %187, %188 : vector<8x256xf32>
    %190 = arith.addf %184, %189 : vector<8x256xf32>
    %191 = vector.extract_strided_slice %0 {offsets = [0, 30], sizes = [8, 1], strides = [1, 1]} : vector<8x36xf32> to vector<8x1xf32>
    %192 = vector.extract_strided_slice %178 {offsets = [2, 0], sizes = [1, 256], strides = [1, 1]} : vector<4x256xf32> to vector<1x256xf32>
    %193 = vector.broadcast %191 : vector<8x1xf32> to vector<8x256xf32>
    %194 = vector.broadcast %192 : vector<1x256xf32> to vector<8x256xf32>
    %195 = arith.mulf %193, %194 : vector<8x256xf32>
    %196 = arith.addf %190, %195 : vector<8x256xf32>
    %197 = vector.extract_strided_slice %0 {offsets = [0, 31], sizes = [8, 1], strides = [1, 1]} : vector<8x36xf32> to vector<8x1xf32>
    %198 = vector.extract_strided_slice %178 {offsets = [3, 0], sizes = [1, 256], strides = [1, 1]} : vector<4x256xf32> to vector<1x256xf32>
    %199 = vector.broadcast %197 : vector<8x1xf32> to vector<8x256xf32>
    %200 = vector.broadcast %198 : vector<1x256xf32> to vector<8x256xf32>
    %201 = arith.mulf %199, %200 : vector<8x256xf32>
    %202 = arith.addf %196, %201 : vector<8x256xf32>
    %c222_i32 = arith.constant 222 : i32
    %203 = tpu.dynamic_rotate %2 by %c222_i32 dim 1 : vector<4x256xf32>, i32 -> vector<4x256xf32>
    %204 = vector.extract_strided_slice %0 {offsets = [0, 32], sizes = [8, 1], strides = [1, 1]} : vector<8x36xf32> to vector<8x1xf32>
    %205 = vector.extract_strided_slice %203 {offsets = [0, 0], sizes = [1, 256], strides = [1, 1]} : vector<4x256xf32> to vector<1x256xf32>
    %206 = vector.broadcast %204 : vector<8x1xf32> to vector<8x256xf32>
    %207 = vector.broadcast %205 : vector<1x256xf32> to vector<8x256xf32>
    %208 = arith.mulf %206, %207 : vector<8x256xf32>
    %209 = arith.addf %202, %208 : vector<8x256xf32>
    %210 = vector.extract_strided_slice %0 {offsets = [0, 33], sizes = [8, 1], strides = [1, 1]} : vector<8x36xf32> to vector<8x1xf32>
    %211 = vector.extract_strided_slice %203 {offsets = [1, 0], sizes = [1, 256], strides = [1, 1]} : vector<4x256xf32> to vector<1x256xf32>
    %212 = vector.broadcast %210 : vector<8x1xf32> to vector<8x256xf32>
    %213 = vector.broadcast %211 : vector<1x256xf32> to vector<8x256xf32>
    %214 = arith.mulf %212, %213 : vector<8x256xf32>
    %215 = arith.addf %209, %214 : vector<8x256xf32>
    %216 = vector.extract_strided_slice %0 {offsets = [0, 34], sizes = [8, 1], strides = [1, 1]} : vector<8x36xf32> to vector<8x1xf32>
    %217 = vector.extract_strided_slice %203 {offsets = [2, 0], sizes = [1, 256], strides = [1, 1]} : vector<4x256xf32> to vector<1x256xf32>
    %218 = vector.broadcast %216 : vector<8x1xf32> to vector<8x256xf32>
    %219 = vector.broadcast %217 : vector<1x256xf32> to vector<8x256xf32>
    %220 = arith.mulf %218, %219 : vector<8x256xf32>
    %221 = arith.addf %215, %220 : vector<8x256xf32>
    %222 = vector.extract_strided_slice %0 {offsets = [0, 35], sizes = [8, 1], strides = [1, 1]} : vector<8x36xf32> to vector<8x1xf32>
    %223 = vector.extract_strided_slice %203 {offsets = [3, 0], sizes = [1, 256], strides = [1, 1]} : vector<4x256xf32> to vector<1x256xf32>
    %224 = vector.broadcast %222 : vector<8x1xf32> to vector<8x256xf32>
    %225 = vector.broadcast %223 : vector<1x256xf32> to vector<8x256xf32>
    %226 = arith.mulf %224, %225 : vector<8x256xf32>
    %227 = arith.addf %221, %226 : vector<8x256xf32>
    %c0_4 = arith.constant 0 : index
    %c0_5 = arith.constant 0 : index
    %c0_6 = arith.constant 0 : index
    %228 = vector.load %arg3[%c0_4, %c0_5, %c0_6] : memref<2x8x256xf32, #tpu.memory_space<vmem>>, vector<1x8x256xf32>
    %229 = vector.shape_cast %228 : vector<1x8x256xf32> to vector<8x256xf32>
    %230 = vector.shape_cast %227 : vector<8x256xf32> to vector<1x8x256xf32>
    tpu.vector_store %arg3[%c0_4, %c0_5, %c0_6], %230 {strides = array<i32>} : memref<2x8x256xf32, #tpu.memory_space<vmem>>, vector<1x8x256xf32>,
    %c1 = arith.constant 1 : index
    %c0_7 = arith.constant 0 : index
    %c0_8 = arith.constant 0 : index
    %231 = vector.load %arg1[%c1, %c0_7, %c0_8] : memref<2x4x256xf32, #tpu.memory_space<vmem>>, vector<1x4x256xf32>
    %232 = vector.shape_cast %231 : vector<1x4x256xf32> to vector<4x256xf32>
    %cst_9 = arith.constant 0.000000e+00 : f32
    %233 = vector.broadcast %cst_9 : f32 to vector<8x256xf32>
    %234 = vector.extract_strided_slice %0 {offsets = [0, 0], sizes = [8, 1], strides = [1, 1]} : vector<8x36xf32> to vector<8x1xf32>
    %235 = vector.extract_strided_slice %232 {offsets = [0, 0], sizes = [1, 256], strides = [1, 1]} : vector<4x256xf32> to vector<1x256xf32>
    %236 = vector.broadcast %234 : vector<8x1xf32> to vector<8x256xf32>
    %237 = vector.broadcast %235 : vector<1x256xf32> to vector<8x256xf32>
    %238 = arith.mulf %236, %237 : vector<8x256xf32>
    %239 = arith.addf %233, %238 : vector<8x256xf32>
    %240 = vector.extract_strided_slice %0 {offsets = [0, 1], sizes = [8, 1], strides = [1, 1]} : vector<8x36xf32> to vector<8x1xf32>
    %241 = vector.extract_strided_slice %232 {offsets = [1, 0], sizes = [1, 256], strides = [1, 1]} : vector<4x256xf32> to vector<1x256xf32>
    %242 = vector.broadcast %240 : vector<8x1xf32> to vector<8x256xf32>
    %243 = vector.broadcast %241 : vector<1x256xf32> to vector<8x256xf32>
    %244 = arith.mulf %242, %243 : vector<8x256xf32>
    %245 = arith.addf %239, %244 : vector<8x256xf32>
    %246 = vector.extract_strided_slice %0 {offsets = [0, 2], sizes = [8, 1], strides = [1, 1]} : vector<8x36xf32> to vector<8x1xf32>
    %247 = vector.extract_strided_slice %232 {offsets = [2, 0], sizes = [1, 256], strides = [1, 1]} : vector<4x256xf32> to vector<1x256xf32>
    %248 = vector.broadcast %246 : vector<8x1xf32> to vector<8x256xf32>
    %249 = vector.broadcast %247 : vector<1x256xf32> to vector<8x256xf32>
    %250 = arith.mulf %248, %249 : vector<8x256xf32>
    %251 = arith.addf %245, %250 : vector<8x256xf32>
    %252 = vector.extract_strided_slice %0 {offsets = [0, 3], sizes = [8, 1], strides = [1, 1]} : vector<8x36xf32> to vector<8x1xf32>
    %253 = vector.extract_strided_slice %232 {offsets = [3, 0], sizes = [1, 256], strides = [1, 1]} : vector<4x256xf32> to vector<1x256xf32>
    %254 = vector.broadcast %252 : vector<8x1xf32> to vector<8x256xf32>
    %255 = vector.broadcast %253 : vector<1x256xf32> to vector<8x256xf32>
    %256 = arith.mulf %254, %255 : vector<8x256xf32>
    %257 = arith.addf %251, %256 : vector<8x256xf32>
    %c255_i32_10 = arith.constant 255 : i32
    %258 = tpu.dynamic_rotate %232 by %c255_i32_10 dim 1 : vector<4x256xf32>, i32 -> vector<4x256xf32>
    %259 = vector.extract_strided_slice %0 {offsets = [0, 4], sizes = [8, 1], strides = [1, 1]} : vector<8x36xf32> to vector<8x1xf32>
    %260 = vector.extract_strided_slice %258 {offsets = [0, 0], sizes = [1, 256], strides = [1, 1]} : vector<4x256xf32> to vector<1x256xf32>
    %261 = vector.broadcast %259 : vector<8x1xf32> to vector<8x256xf32>
    %262 = vector.broadcast %260 : vector<1x256xf32> to vector<8x256xf32>
    %263 = arith.mulf %261, %262 : vector<8x256xf32>
    %264 = arith.addf %257, %263 : vector<8x256xf32>
    %265 = vector.extract_strided_slice %0 {offsets = [0, 5], sizes = [8, 1], strides = [1, 1]} : vector<8x36xf32> to vector<8x1xf32>
    %266 = vector.extract_strided_slice %258 {offsets = [1, 0], sizes = [1, 256], strides = [1, 1]} : vector<4x256xf32> to vector<1x256xf32>
    %267 = vector.broadcast %265 : vector<8x1xf32> to vector<8x256xf32>
    %268 = vector.broadcast %266 : vector<1x256xf32> to vector<8x256xf32>
    %269 = arith.mulf %267, %268 : vector<8x256xf32>
    %270 = arith.addf %264, %269 : vector<8x256xf32>
    %271 = vector.extract_strided_slice %0 {offsets = [0, 6], sizes = [8, 1], strides = [1, 1]} : vector<8x36xf32> to vector<8x1xf32>
    %272 = vector.extract_strided_slice %258 {offsets = [2, 0], sizes = [1, 256], strides = [1, 1]} : vector<4x256xf32> to vector<1x256xf32>
    %273 = vector.broadcast %271 : vector<8x1xf32> to vector<8x256xf32>
    %274 = vector.broadcast %272 : vector<1x256xf32> to vector<8x256xf32>
    %275 = arith.mulf %273, %274 : vector<8x256xf32>
    %276 = arith.addf %270, %275 : vector<8x256xf32>
    %277 = vector.extract_strided_slice %0 {offsets = [0, 7], sizes = [8, 1], strides = [1, 1]} : vector<8x36xf32> to vector<8x1xf32>
    %278 = vector.extract_strided_slice %258 {offsets = [3, 0], sizes = [1, 256], strides = [1, 1]} : vector<4x256xf32> to vector<1x256xf32>
    %279 = vector.broadcast %277 : vector<8x1xf32> to vector<8x256xf32>
    %280 = vector.broadcast %278 : vector<1x256xf32> to vector<8x256xf32>
    %281 = arith.mulf %279, %280 : vector<8x256xf32>
    %282 = arith.addf %276, %281 : vector<8x256xf32>
    %c254_i32_11 = arith.constant 254 : i32
    %283 = tpu.dynamic_rotate %232 by %c254_i32_11 dim 1 : vector<4x256xf32>, i32 -> vector<4x256xf32>
    %284 = vector.extract_strided_slice %0 {offsets = [0, 8], sizes = [8, 1], strides = [1, 1]} : vector<8x36xf32> to vector<8x1xf32>
    %285 = vector.extract_strided_slice %283 {offsets = [0, 0], sizes = [1, 256], strides = [1, 1]} : vector<4x256xf32> to vector<1x256xf32>
    %286 = vector.broadcast %284 : vector<8x1xf32> to vector<8x256xf32>
    %287 = vector.broadcast %285 : vector<1x256xf32> to vector<8x256xf32>
    %288 = arith.mulf %286, %287 : vector<8x256xf32>
    %289 = arith.addf %282, %288 : vector<8x256xf32>
    %290 = vector.extract_strided_slice %0 {offsets = [0, 9], sizes = [8, 1], strides = [1, 1]} : vector<8x36xf32> to vector<8x1xf32>
    %291 = vector.extract_strided_slice %283 {offsets = [1, 0], sizes = [1, 256], strides = [1, 1]} : vector<4x256xf32> to vector<1x256xf32>
    %292 = vector.broadcast %290 : vector<8x1xf32> to vector<8x256xf32>
    %293 = vector.broadcast %291 : vector<1x256xf32> to vector<8x256xf32>
    %294 = arith.mulf %292, %293 : vector<8x256xf32>
    %295 = arith.addf %289, %294 : vector<8x256xf32>
    %296 = vector.extract_strided_slice %0 {offsets = [0, 10], sizes = [8, 1], strides = [1, 1]} : vector<8x36xf32> to vector<8x1xf32>
    %297 = vector.extract_strided_slice %283 {offsets = [2, 0], sizes = [1, 256], strides = [1, 1]} : vector<4x256xf32> to vector<1x256xf32>
    %298 = vector.broadcast %296 : vector<8x1xf32> to vector<8x256xf32>
    %299 = vector.broadcast %297 : vector<1x256xf32> to vector<8x256xf32>
    %300 = arith.mulf %298, %299 : vector<8x256xf32>
    %301 = arith.addf %295, %300 : vector<8x256xf32>
    %302 = vector.extract_strided_slice %0 {offsets = [0, 11], sizes = [8, 1], strides = [1, 1]} : vector<8x36xf32> to vector<8x1xf32>
    %303 = vector.extract_strided_slice %283 {offsets = [3, 0], sizes = [1, 256], strides = [1, 1]} : vector<4x256xf32> to vector<1x256xf32>
    %304 = vector.broadcast %302 : vector<8x1xf32> to vector<8x256xf32>
    %305 = vector.broadcast %303 : vector<1x256xf32> to vector<8x256xf32>
    %306 = arith.mulf %304, %305 : vector<8x256xf32>
    %307 = arith.addf %301, %306 : vector<8x256xf32>
    %c240_i32_12 = arith.constant 240 : i32
    %308 = tpu.dynamic_rotate %232 by %c240_i32_12 dim 1 : vector<4x256xf32>, i32 -> vector<4x256xf32>
    %309 = vector.extract_strided_slice %0 {offsets = [0, 12], sizes = [8, 1], strides = [1, 1]} : vector<8x36xf32> to vector<8x1xf32>
    %310 = vector.extract_strided_slice %308 {offsets = [0, 0], sizes = [1, 256], strides = [1, 1]} : vector<4x256xf32> to vector<1x256xf32>
    %311 = vector.broadcast %309 : vector<8x1xf32> to vector<8x256xf32>
    %312 = vector.broadcast %310 : vector<1x256xf32> to vector<8x256xf32>
    %313 = arith.mulf %311, %312 : vector<8x256xf32>
    %314 = arith.addf %307, %313 : vector<8x256xf32>
    %315 = vector.extract_strided_slice %0 {offsets = [0, 13], sizes = [8, 1], strides = [1, 1]} : vector<8x36xf32> to vector<8x1xf32>
    %316 = vector.extract_strided_slice %308 {offsets = [1, 0], sizes = [1, 256], strides = [1, 1]} : vector<4x256xf32> to vector<1x256xf32>
    %317 = vector.broadcast %315 : vector<8x1xf32> to vector<8x256xf32>
    %318 = vector.broadcast %316 : vector<1x256xf32> to vector<8x256xf32>
    %319 = arith.mulf %317, %318 : vector<8x256xf32>
    %320 = arith.addf %314, %319 : vector<8x256xf32>
    %321 = vector.extract_strided_slice %0 {offsets = [0, 14], sizes = [8, 1], strides = [1, 1]} : vector<8x36xf32> to vector<8x1xf32>
    %322 = vector.extract_strided_slice %308 {offsets = [2, 0], sizes = [1, 256], strides = [1, 1]} : vector<4x256xf32> to vector<1x256xf32>
    %323 = vector.broadcast %321 : vector<8x1xf32> to vector<8x256xf32>
    %324 = vector.broadcast %322 : vector<1x256xf32> to vector<8x256xf32>
    %325 = arith.mulf %323, %324 : vector<8x256xf32>
    %326 = arith.addf %320, %325 : vector<8x256xf32>
    %327 = vector.extract_strided_slice %0 {offsets = [0, 15], sizes = [8, 1], strides = [1, 1]} : vector<8x36xf32> to vector<8x1xf32>
    %328 = vector.extract_strided_slice %308 {offsets = [3, 0], sizes = [1, 256], strides = [1, 1]} : vector<4x256xf32> to vector<1x256xf32>
    %329 = vector.broadcast %327 : vector<8x1xf32> to vector<8x256xf32>
    %330 = vector.broadcast %328 : vector<1x256xf32> to vector<8x256xf32>
    %331 = arith.mulf %329, %330 : vector<8x256xf32>
    %332 = arith.addf %326, %331 : vector<8x256xf32>
    %c239_i32_13 = arith.constant 239 : i32
    %333 = tpu.dynamic_rotate %232 by %c239_i32_13 dim 1 : vector<4x256xf32>, i32 -> vector<4x256xf32>
    %334 = vector.extract_strided_slice %0 {offsets = [0, 16], sizes = [8, 1], strides = [1, 1]} : vector<8x36xf32> to vector<8x1xf32>
    %335 = vector.extract_strided_slice %333 {offsets = [0, 0], sizes = [1, 256], strides = [1, 1]} : vector<4x256xf32> to vector<1x256xf32>
    %336 = vector.broadcast %334 : vector<8x1xf32> to vector<8x256xf32>
    %337 = vector.broadcast %335 : vector<1x256xf32> to vector<8x256xf32>
    %338 = arith.mulf %336, %337 : vector<8x256xf32>
    %339 = arith.addf %332, %338 : vector<8x256xf32>
    %340 = vector.extract_strided_slice %0 {offsets = [0, 17], sizes = [8, 1], strides = [1, 1]} : vector<8x36xf32> to vector<8x1xf32>
    %341 = vector.extract_strided_slice %333 {offsets = [1, 0], sizes = [1, 256], strides = [1, 1]} : vector<4x256xf32> to vector<1x256xf32>
    %342 = vector.broadcast %340 : vector<8x1xf32> to vector<8x256xf32>
    %343 = vector.broadcast %341 : vector<1x256xf32> to vector<8x256xf32>
    %344 = arith.mulf %342, %343 : vector<8x256xf32>
    %345 = arith.addf %339, %344 : vector<8x256xf32>
    %346 = vector.extract_strided_slice %0 {offsets = [0, 18], sizes = [8, 1], strides = [1, 1]} : vector<8x36xf32> to vector<8x1xf32>
    %347 = vector.extract_strided_slice %333 {offsets = [2, 0], sizes = [1, 256], strides = [1, 1]} : vector<4x256xf32> to vector<1x256xf32>
    %348 = vector.broadcast %346 : vector<8x1xf32> to vector<8x256xf32>
    %349 = vector.broadcast %347 : vector<1x256xf32> to vector<8x256xf32>
    %350 = arith.mulf %348, %349 : vector<8x256xf32>
    %351 = arith.addf %345, %350 : vector<8x256xf32>
    %352 = vector.extract_strided_slice %0 {offsets = [0, 19], sizes = [8, 1], strides = [1, 1]} : vector<8x36xf32> to vector<8x1xf32>
    %353 = vector.extract_strided_slice %333 {offsets = [3, 0], sizes = [1, 256], strides = [1, 1]} : vector<4x256xf32> to vector<1x256xf32>
    %354 = vector.broadcast %352 : vector<8x1xf32> to vector<8x256xf32>
    %355 = vector.broadcast %353 : vector<1x256xf32> to vector<8x256xf32>
    %356 = arith.mulf %354, %355 : vector<8x256xf32>
    %357 = arith.addf %351, %356 : vector<8x256xf32>
    %c238_i32_14 = arith.constant 238 : i32
    %358 = tpu.dynamic_rotate %232 by %c238_i32_14 dim 1 : vector<4x256xf32>, i32 -> vector<4x256xf32>
    %359 = vector.extract_strided_slice %0 {offsets = [0, 20], sizes = [8, 1], strides = [1, 1]} : vector<8x36xf32> to vector<8x1xf32>
    %360 = vector.extract_strided_slice %358 {offsets = [0, 0], sizes = [1, 256], strides = [1, 1]} : vector<4x256xf32> to vector<1x256xf32>
    %361 = vector.broadcast %359 : vector<8x1xf32> to vector<8x256xf32>
    %362 = vector.broadcast %360 : vector<1x256xf32> to vector<8x256xf32>
    %363 = arith.mulf %361, %362 : vector<8x256xf32>
    %364 = arith.addf %357, %363 : vector<8x256xf32>
    %365 = vector.extract_strided_slice %0 {offsets = [0, 21], sizes = [8, 1], strides = [1, 1]} : vector<8x36xf32> to vector<8x1xf32>
    %366 = vector.extract_strided_slice %358 {offsets = [1, 0], sizes = [1, 256], strides = [1, 1]} : vector<4x256xf32> to vector<1x256xf32>
    %367 = vector.broadcast %365 : vector<8x1xf32> to vector<8x256xf32>
    %368 = vector.broadcast %366 : vector<1x256xf32> to vector<8x256xf32>
    %369 = arith.mulf %367, %368 : vector<8x256xf32>
    %370 = arith.addf %364, %369 : vector<8x256xf32>
    %371 = vector.extract_strided_slice %0 {offsets = [0, 22], sizes = [8, 1], strides = [1, 1]} : vector<8x36xf32> to vector<8x1xf32>
    %372 = vector.extract_strided_slice %358 {offsets = [2, 0], sizes = [1, 256], strides = [1, 1]} : vector<4x256xf32> to vector<1x256xf32>
    %373 = vector.broadcast %371 : vector<8x1xf32> to vector<8x256xf32>
    %374 = vector.broadcast %372 : vector<1x256xf32> to vector<8x256xf32>
    %375 = arith.mulf %373, %374 : vector<8x256xf32>
    %376 = arith.addf %370, %375 : vector<8x256xf32>
    %377 = vector.extract_strided_slice %0 {offsets = [0, 23], sizes = [8, 1], strides = [1, 1]} : vector<8x36xf32> to vector<8x1xf32>
    %378 = vector.extract_strided_slice %358 {offsets = [3, 0], sizes = [1, 256], strides = [1, 1]} : vector<4x256xf32> to vector<1x256xf32>
    %379 = vector.broadcast %377 : vector<8x1xf32> to vector<8x256xf32>
    %380 = vector.broadcast %378 : vector<1x256xf32> to vector<8x256xf32>
    %381 = arith.mulf %379, %380 : vector<8x256xf32>
    %382 = arith.addf %376, %381 : vector<8x256xf32>
    %c224_i32_15 = arith.constant 224 : i32
    %383 = tpu.dynamic_rotate %232 by %c224_i32_15 dim 1 : vector<4x256xf32>, i32 -> vector<4x256xf32>
    %384 = vector.extract_strided_slice %0 {offsets = [0, 24], sizes = [8, 1], strides = [1, 1]} : vector<8x36xf32> to vector<8x1xf32>
    %385 = vector.extract_strided_slice %383 {offsets = [0, 0], sizes = [1, 256], strides = [1, 1]} : vector<4x256xf32> to vector<1x256xf32>
    %386 = vector.broadcast %384 : vector<8x1xf32> to vector<8x256xf32>
    %387 = vector.broadcast %385 : vector<1x256xf32> to vector<8x256xf32>
    %388 = arith.mulf %386, %387 : vector<8x256xf32>
    %389 = arith.addf %382, %388 : vector<8x256xf32>
    %390 = vector.extract_strided_slice %0 {offsets = [0, 25], sizes = [8, 1], strides = [1, 1]} : vector<8x36xf32> to vector<8x1xf32>
    %391 = vector.extract_strided_slice %383 {offsets = [1, 0], sizes = [1, 256], strides = [1, 1]} : vector<4x256xf32> to vector<1x256xf32>
    %392 = vector.broadcast %390 : vector<8x1xf32> to vector<8x256xf32>
    %393 = vector.broadcast %391 : vector<1x256xf32> to vector<8x256xf32>
    %394 = arith.mulf %392, %393 : vector<8x256xf32>
    %395 = arith.addf %389, %394 : vector<8x256xf32>
    %396 = vector.extract_strided_slice %0 {offsets = [0, 26], sizes = [8, 1], strides = [1, 1]} : vector<8x36xf32> to vector<8x1xf32>
    %397 = vector.extract_strided_slice %383 {offsets = [2, 0], sizes = [1, 256], strides = [1, 1]} : vector<4x256xf32> to vector<1x256xf32>
    %398 = vector.broadcast %396 : vector<8x1xf32> to vector<8x256xf32>
    %399 = vector.broadcast %397 : vector<1x256xf32> to vector<8x256xf32>
    %400 = arith.mulf %398, %399 : vector<8x256xf32>
    %401 = arith.addf %395, %400 : vector<8x256xf32>
    %402 = vector.extract_strided_slice %0 {offsets = [0, 27], sizes = [8, 1], strides = [1, 1]} : vector<8x36xf32> to vector<8x1xf32>
    %403 = vector.extract_strided_slice %383 {offsets = [3, 0], sizes = [1, 256], strides = [1, 1]} : vector<4x256xf32> to vector<1x256xf32>
    %404 = vector.broadcast %402 : vector<8x1xf32> to vector<8x256xf32>
    %405 = vector.broadcast %403 : vector<1x256xf32> to vector<8x256xf32>
    %406 = arith.mulf %404, %405 : vector<8x256xf32>
    %407 = arith.addf %401, %406 : vector<8x256xf32>
    %c223_i32_16 = arith.constant 223 : i32
    %408 = tpu.dynamic_rotate %232 by %c223_i32_16 dim 1 : vector<4x256xf32>, i32 -> vector<4x256xf32>
    %409 = vector.extract_strided_slice %0 {offsets = [0, 28], sizes = [8, 1], strides = [1, 1]} : vector<8x36xf32> to vector<8x1xf32>
    %410 = vector.extract_strided_slice %408 {offsets = [0, 0], sizes = [1, 256], strides = [1, 1]} : vector<4x256xf32> to vector<1x256xf32>
    %411 = vector.broadcast %409 : vector<8x1xf32> to vector<8x256xf32>
    %412 = vector.broadcast %410 : vector<1x256xf32> to vector<8x256xf32>
    %413 = arith.mulf %411, %412 : vector<8x256xf32>
    %414 = arith.addf %407, %413 : vector<8x256xf32>
    %415 = vector.extract_strided_slice %0 {offsets = [0, 29], sizes = [8, 1], strides = [1, 1]} : vector<8x36xf32> to vector<8x1xf32>
    %416 = vector.extract_strided_slice %408 {offsets = [1, 0], sizes = [1, 256], strides = [1, 1]} : vector<4x256xf32> to vector<1x256xf32>
    %417 = vector.broadcast %415 : vector<8x1xf32> to vector<8x256xf32>
    %418 = vector.broadcast %416 : vector<1x256xf32> to vector<8x256xf32>
    %419 = arith.mulf %417, %418 : vector<8x256xf32>
    %420 = arith.addf %414, %419 : vector<8x256xf32>
    %421 = vector.extract_strided_slice %0 {offsets = [0, 30], sizes = [8, 1], strides = [1, 1]} : vector<8x36xf32> to vector<8x1xf32>
    %422 = vector.extract_strided_slice %408 {offsets = [2, 0], sizes = [1, 256], strides = [1, 1]} : vector<4x256xf32> to vector<1x256xf32>
    %423 = vector.broadcast %421 : vector<8x1xf32> to vector<8x256xf32>
    %424 = vector.broadcast %422 : vector<1x256xf32> to vector<8x256xf32>
    %425 = arith.mulf %423, %424 : vector<8x256xf32>
    %426 = arith.addf %420, %425 : vector<8x256xf32>
    %427 = vector.extract_strided_slice %0 {offsets = [0, 31], sizes = [8, 1], strides = [1, 1]} : vector<8x36xf32> to vector<8x1xf32>
    %428 = vector.extract_strided_slice %408 {offsets = [3, 0], sizes = [1, 256], strides = [1, 1]} : vector<4x256xf32> to vector<1x256xf32>
    %429 = vector.broadcast %427 : vector<8x1xf32> to vector<8x256xf32>
    %430 = vector.broadcast %428 : vector<1x256xf32> to vector<8x256xf32>
    %431 = arith.mulf %429, %430 : vector<8x256xf32>
    %432 = arith.addf %426, %431 : vector<8x256xf32>
    %c222_i32_17 = arith.constant 222 : i32
    %433 = tpu.dynamic_rotate %232 by %c222_i32_17 dim 1 : vector<4x256xf32>, i32 -> vector<4x256xf32>
    %434 = vector.extract_strided_slice %0 {offsets = [0, 32], sizes = [8, 1], strides = [1, 1]} : vector<8x36xf32> to vector<8x1xf32>
    %435 = vector.extract_strided_slice %433 {offsets = [0, 0], sizes = [1, 256], strides = [1, 1]} : vector<4x256xf32> to vector<1x256xf32>
    %436 = vector.broadcast %434 : vector<8x1xf32> to vector<8x256xf32>
    %437 = vector.broadcast %435 : vector<1x256xf32> to vector<8x256xf32>
    %438 = arith.mulf %436, %437 : vector<8x256xf32>
    %439 = arith.addf %432, %438 : vector<8x256xf32>
    %440 = vector.extract_strided_slice %0 {offsets = [0, 33], sizes = [8, 1], strides = [1, 1]} : vector<8x36xf32> to vector<8x1xf32>
    %441 = vector.extract_strided_slice %433 {offsets = [1, 0], sizes = [1, 256], strides = [1, 1]} : vector<4x256xf32> to vector<1x256xf32>
    %442 = vector.broadcast %440 : vector<8x1xf32> to vector<8x256xf32>
    %443 = vector.broadcast %441 : vector<1x256xf32> to vector<8x256xf32>
    %444 = arith.mulf %442, %443 : vector<8x256xf32>
    %445 = arith.addf %439, %444 : vector<8x256xf32>
    %446 = vector.extract_strided_slice %0 {offsets = [0, 34], sizes = [8, 1], strides = [1, 1]} : vector<8x36xf32> to vector<8x1xf32>
    %447 = vector.extract_strided_slice %433 {offsets = [2, 0], sizes = [1, 256], strides = [1, 1]} : vector<4x256xf32> to vector<1x256xf32>
    %448 = vector.broadcast %446 : vector<8x1xf32> to vector<8x256xf32>
    %449 = vector.broadcast %447 : vector<1x256xf32> to vector<8x256xf32>
    %450 = arith.mulf %448, %449 : vector<8x256xf32>
    %451 = arith.addf %445, %450 : vector<8x256xf32>
    %452 = vector.extract_strided_slice %0 {offsets = [0, 35], sizes = [8, 1], strides = [1, 1]} : vector<8x36xf32> to vector<8x1xf32>
    %453 = vector.extract_strided_slice %433 {offsets = [3, 0], sizes = [1, 256], strides = [1, 1]} : vector<4x256xf32> to vector<1x256xf32>
    %454 = vector.broadcast %452 : vector<8x1xf32> to vector<8x256xf32>
    %455 = vector.broadcast %453 : vector<1x256xf32> to vector<8x256xf32>
    %456 = arith.mulf %454, %455 : vector<8x256xf32>
    %457 = arith.addf %451, %456 : vector<8x256xf32>
    %c1_18 = arith.constant 1 : index
    %c0_19 = arith.constant 0 : index
    %c0_20 = arith.constant 0 : index
    %458 = vector.load %arg3[%c1_18, %c0_19, %c0_20] : memref<2x8x256xf32, #tpu.memory_space<vmem>>, vector<1x8x256xf32>
    %459 = vector.shape_cast %458 : vector<1x8x256xf32> to vector<8x256xf32>
    %460 = vector.shape_cast %457 : vector<8x256xf32> to vector<1x8x256xf32>
    tpu.vector_store %arg3[%c1_18, %c0_19, %c0_20], %460 {strides = array<i32>} : memref<2x8x256xf32, #tpu.memory_space<vmem>>, vector<1x8x256xf32>,
    return
  }
  func.func @transform_0(%arg0: i32) -> (i32, i32, i32) {
    %c0_i32 = arith.constant 0 : i32
    %c0_i32_0 = arith.constant 0 : i32
    %c0_i32_1 = arith.constant 0 : i32
    return %arg0, %c0_i32, %c0_i32_0 : i32, i32, i32
  }
  func.func @transform_1(%arg0: i32) -> (i32, i32) {
    %c0_i32 = arith.constant 0 : i32
    %c0_i32_0 = arith.constant 0 : i32
    %c0_i32_1 = arith.constant 0 : i32
    return %c0_i32, %c0_i32_0 : i32, i32
  }
  func.func @transform_2(%arg0: i32) -> (i32, i32, i32) {
    %c0_i32 = arith.constant 0 : i32
    %c0_i32_0 = arith.constant 0 : i32
    %c0_i32_1 = arith.constant 0 : i32
    return %arg0, %c0_i32, %c0_i32_0 : i32, i32, i32
  }
}

</mosaic_0001>

<llo_original>
// kernel: tpu_custom_call.1
$region0: #{tpu_custom_call.1}
  #allocation0 [shape = 'u32[]', space=smem, size = 0x4, offset = 0x4, fixed_abs, tag = 'smem constant byte address 0x4 - core index']
  #allocation1 [shape = 'u32[72,128]{1,0:T(1,128)}', space=vmem, size = 0x9000, scoped, tag = 'internal scratch']
  %s0 = inlined_call_operand.hbm [shape: f32[2,4,256], index: 0, kind: input, shape index: {}]
  %s1 = inlined_call_operand.hbm [shape: f32[8,36], index: 1, kind: input, shape index: {}]
  %s2 = inlined_call_operand.hbm [shape: f32[2,8,256], index: 2, kind: output, shape index: {}]
  %s3 = sld [smem:[#allocation0]]
  $region26: #{tpu_custom_call.1} parent=0
    _
  %s5 = ssub.s32 1, %s3
  %s6 = scalar_select 0, %s5, %s3
  $region1: #{tpu_custom_call.1} parent=0
    #allocation2 [shape = 'u8[8192]{0}', space=vmem, size = 0x2000, scoped, tag = 'input window, operand 0, single buffered']
    #allocation3 [shape = 's32[1]{0}', space=sflag, size = 0x4, scoped, tag = 'scoped memory for tpu_custom_call.1']
    #allocation4 [shape = 's32[1]{0}', space=sflag, size = 0x4, scoped, tag = 'scoped memory for tpu_custom_call.1']
    #allocation5 [shape = 'u8[4096]{0}', space=vmem, size = 0x1000, scoped, tag = 'input window, operand 1, single buffered']
    #allocation6 [shape = 's32[1]{0}', space=sflag, size = 0x4, scoped, tag = 'scoped memory for tpu_custom_call.1']
    #allocation7 [shape = 'u8[16384]{0}', space=vmem, size = 0x4000, scoped, tag = 'output window, operand 0, single buffered']
    %7 = vsyncpa [#allocation3], 0
    %8 = vsyncpa [#allocation6], 0
    %9 = vsyncpa [#allocation4], 0
    // Predicated region
    $region2: #{tpu_custom_call.1} parent=1 // pred_check
      _
    $region3: #{tpu_custom_call.1} parent=1 // pred_check_branch
      %11 = sbr.rel (0) target = $region5
    $region4: #{tpu_custom_call.1} parent=1 // pred_region
      %13 = vsyncadd [#allocation3], 0
      %s14 = sshll.u32 %s0, 4
      %s15 = int_to_ptr.hbm [resolvable:$true] %s14
      %s16 = sshll.u32 [#allocation2], 4
      %s17 = int_to_ptr.vmem [resolvable:$true] %s16
      %22 = dma.hbm_to_vmem [thread:$0]  %s15, 256, %s17, [#allocation3], 128, 128, 8
    $region5: #{tpu_custom_call.1} parent=1 // pred_fallthru
      _
    // Predicated region
    $region6: #{tpu_custom_call.1} parent=1 // pred_check
      _
    $region7: #{tpu_custom_call.1} parent=1 // pred_check_branch
      %24 = sbr.rel (0) target = $region9
    $region8: #{tpu_custom_call.1} parent=1 // pred_region
      %26 = vsyncadd [#allocation6], 0
      %s28 = sshll.u32 %s1, 4
      %s29 = int_to_ptr.hbm [resolvable:$true] %s28
      %s30 = sshll.u32 [#allocation5], 4
      %s31 = int_to_ptr.vmem [resolvable:$true] %s30
      %33 = dma.hbm_to_vmem [thread:$0]  %s29, 128, %s31, [#allocation6]
    $region9: #{tpu_custom_call.1} parent=1 // pred_fallthru
      _
    // Predicated region
    $region10: #{tpu_custom_call.1} parent=1 // pred_check
      _
    $region11: #{tpu_custom_call.1} parent=1 // pred_check_branch
      %35 = sbr.rel (0) target = $region13
    $region12: #{tpu_custom_call.1} parent=1 // pred_region
      %37 = dma.done [#allocation3], 256
    $region13: #{tpu_custom_call.1} parent=1 // pred_fallthru
      _
    // Predicated region
    $region14: #{tpu_custom_call.1} parent=1 // pred_check
      _
    $region15: #{tpu_custom_call.1} parent=1 // pred_check_branch
      %39 = sbr.rel (0) target = $region17
    $region16: #{tpu_custom_call.1} parent=1 // pred_region
      %41 = dma.done [#allocation6], 128
    $region17: #{tpu_custom_call.1} parent=1 // pred_fallthru
      _
    %v42 = vld [vmem:[#allocation5] sm:$0xff]
    %v43 = vld [vmem:[#allocation2] sm:$0xff]
    %45 = vset.pattern.permute.xlu0 0
    %46 = vperm.xlu0 %45, %v42
    %v47 = vpop.permute.xlu0 %46
    %v50 = vperm.slane %v43, 0
    %v51 = vperm.slane %v43, 4
    %v54 = vperm.slane %v50, 0
    %v55 = vperm.slane %v51, 0
    %v56 = vmul.f32 %v47, %v54
    %v57 = vmul.f32 %v47, %v55
    %v58 = vadd.f32 %v56, 0.0
    %v59 = vadd.f32 %v57, 0.0
    %60 = vset.pattern.permute.xlu0 1
    %61 = vperm.xlu0 %60, %v42
    %v62 = vpop.permute.xlu0 %61
    %v64 = vperm.slane %v43, 1
    %v65 = vperm.slane %v43, 5
    %v68 = vperm.slane %v64, 1
    %v69 = vperm.slane %v65, 1
    %v70 = vmul.f32 %v62, %v68
    %v71 = vmul.f32 %v62, %v69
    %v72 = vadd.f32 %v58, %v70
    %v73 = vadd.f32 %v59, %v71
    %74 = vset.pattern.permute.xlu0 2
    %75 = vperm.xlu0 %74, %v42
    %v76 = vpop.permute.xlu0 %75
    %v78 = vperm.slane %v43, 2
    %v79 = vperm.slane %v43, 6
    %v82 = vperm.slane %v78, 2
    %v83 = vperm.slane %v79, 2
    %v84 = vmul.f32 %v76, %v82
    %v85 = vmul.f32 %v76, %v83
    %v86 = vadd.f32 %v72, %v84
    %v87 = vadd.f32 %v73, %v85
    %88 = vset.pattern.permute.xlu0 3
    %89 = vperm.xlu0 %88, %v42
    %v90 = vpop.permute.xlu0 %89
    %v92 = vperm.slane %v43, 3
    %v93 = vperm.slane %v43, 7
    %v96 = vperm.slane %v92, 3
    %v97 = vperm.slane %v93, 3
    %v98 = vmul.f32 %v90, %v96
    %v99 = vmul.f32 %v90, %v97
    %v100 = vadd.f32 %v86, %v98
    %v101 = vadd.f32 %v87, %v99
    %102 = vst [vmem:[#allocation1] ss:$2 sm:$0xff] %v43
    %v103 = vld.sshfl [vmem:[#allocation1] sm:$0xff pattern:$0x75316420]
    %v104 = vld.sshfl [vmem:[#allocation1 + $0x8] sm:$0xff pattern:$0x75316420]
    %107 = vrot.lane.b32.xlu0 %v103, 127
    %v108 = vpop.permute.xlu0 %107
    %109 = vrot.lane.b32.xlu0 %v104, 127
    %v110 = vpop.permute.xlu0 %109
    %v111 = vlaneseq
    %v112 = vand.u32 %v111, 127
    %vm113 = vcmp.lt.s32.totalorder %v112, 127
    %v114 = vsel %vm113, %v108, %v110
    %v115 = vsel %vm113, %v110, %v108
    %116 = vset.pattern.permute.xlu0 4
    %117 = vperm.xlu0 %116, %v42
    %v118 = vpop.permute.xlu0 %117
    %v120 = vperm.slane %v114, 0
    %v121 = vperm.slane %v115, 0
    %v122 = vmul.f32 %v118, %v120
    %v123 = vmul.f32 %v118, %v121
    %v124 = vadd.f32 %v100, %v122
    %v125 = vadd.f32 %v101, %v123
    %126 = vset.pattern.permute.xlu0 5
    %127 = vperm.xlu0 %126, %v42
    %v128 = vpop.permute.xlu0 %127
    %v130 = vperm.slane %v114, 1
    %v131 = vperm.slane %v115, 1
    %v132 = vmul.f32 %v128, %v130
    %v133 = vmul.f32 %v128, %v131
    %v134 = vadd.f32 %v124, %v132
    %v135 = vadd.f32 %v125, %v133
    %136 = vset.pattern.permute.xlu0 6
    %137 = vperm.xlu0 %136, %v42
    %v138 = vpop.permute.xlu0 %137
    %v140 = vperm.slane %v114, 2
    %v141 = vperm.slane %v115, 2
    %v142 = vmul.f32 %v138, %v140
    %v143 = vmul.f32 %v138, %v141
    %v144 = vadd.f32 %v134, %v142
    %v145 = vadd.f32 %v135, %v143
    %146 = vset.pattern.permute.xlu0 7
    %147 = vperm.xlu0 %146, %v42
    %v148 = vpop.permute.xlu0 %147
    %v150 = vperm.slane %v114, 3
    %v151 = vperm.slane %v115, 3
    %v152 = vmul.f32 %v148, %v150
    %v153 = vmul.f32 %v148, %v151
    %v154 = vadd.f32 %v144, %v152
    %v155 = vadd.f32 %v145, %v153
    %156 = vst [vmem:[#allocation1] ss:$2 sm:$0xff] %v43
    %v157 = vld.sshfl [vmem:[#allocation1] sm:$0xff pattern:$0x75316420]
    %v158 = vld.sshfl [vmem:[#allocation1 + $0x8] sm:$0xff pattern:$0x75316420]
    %161 = vrot.lane.b32.xlu0 %v157, 126
    %v162 = vpop.permute.xlu0 %161
    %163 = vrot.lane.b32.xlu0 %v158, 126
    %v164 = vpop.permute.xlu0 %163
    %vm165 = vcmp.lt.s32.totalorder %v112, 126
    %v166 = vsel %vm165, %v162, %v164
    %v167 = vsel %vm165, %v164, %v162
    %168 = vset.pattern.permute.xlu0 8
    %169 = vperm.xlu0 %168, %v42
    %v170 = vpop.permute.xlu0 %169
    %v172 = vperm.slane %v166, 0
    %v173 = vperm.slane %v167, 0
    %v174 = vmul.f32 %v170, %v172
    %v175 = vmul.f32 %v170, %v173
    %v176 = vadd.f32 %v154, %v174
    %v177 = vadd.f32 %v155, %v175
    %178 = vset.pattern.permute.xlu0 9
    %179 = vperm.xlu0 %178, %v42
    %v180 = vpop.permute.xlu0 %179
    %v182 = vperm.slane %v166, 1
    %v183 = vperm.slane %v167, 1
    %v184 = vmul.f32 %v180, %v182
    %v185 = vmul.f32 %v180, %v183
    %v186 = vadd.f32 %v176, %v184
    %v187 = vadd.f32 %v177, %v185
    %188 = vset.pattern.permute.xlu0 10
    %189 = vperm.xlu0 %188, %v42
    %v190 = vpop.permute.xlu0 %189
    %v192 = vperm.slane %v166, 2
    %v193 = vperm.slane %v167, 2
    %v194 = vmul.f32 %v190, %v192
    %v195 = vmul.f32 %v190, %v193
    %v196 = vadd.f32 %v186, %v194
    %v197 = vadd.f32 %v187, %v195
    %198 = vset.pattern.permute.xlu0 11
    %199 = vperm.xlu0 %198, %v42
    %v200 = vpop.permute.xlu0 %199
    %v202 = vperm.slane %v166, 3
    %v203 = vperm.slane %v167, 3
    %v204 = vmul.f32 %v200, %v202
    %v205 = vmul.f32 %v200, %v203
    %v206 = vadd.f32 %v196, %v204
    %v207 = vadd.f32 %v197, %v205
    %208 = vst [vmem:[#allocation1] ss:$2 sm:$0xff] %v43
    %v209 = vld.sshfl [vmem:[#allocation1] sm:$0xff pattern:$0x75316420]
    %v210 = vld.sshfl [vmem:[#allocation1 + $0x8] sm:$0xff pattern:$0x75316420]
    %213 = vrot.lane.b32.xlu0 %v209, 112
    %v214 = vpop.permute.xlu0 %213
    %215 = vrot.lane.b32.xlu0 %v210, 112
    %v216 = vpop.permute.xlu0 %215
    %vm217 = vcmp.lt.s32.totalorder %v112, 112
    %v218 = vsel %vm217, %v214, %v216
    %v219 = vsel %vm217, %v216, %v214
    %220 = vset.pattern.permute.xlu0 12
    %221 = vperm.xlu0 %220, %v42
    %v222 = vpop.permute.xlu0 %221
    %v224 = vperm.slane %v218, 0
    %v225 = vperm.slane %v219, 0
    %v226 = vmul.f32 %v222, %v224
    %v227 = vmul.f32 %v222, %v225
    %v228 = vadd.f32 %v206, %v226
    %v229 = vadd.f32 %v207, %v227
    %230 = vset.pattern.permute.xlu0 13
    %231 = vperm.xlu0 %230, %v42
    %v232 = vpop.permute.xlu0 %231
    %v234 = vperm.slane %v218, 1
    %v235 = vperm.slane %v219, 1
    %v236 = vmul.f32 %v232, %v234
    %v237 = vmul.f32 %v232, %v235
    %v238 = vadd.f32 %v228, %v236
    %v239 = vadd.f32 %v229, %v237
    %240 = vset.pattern.permute.xlu0 14
    %241 = vperm.xlu0 %240, %v42
    %v242 = vpop.permute.xlu0 %241
    %v244 = vperm.slane %v218, 2
    %v245 = vperm.slane %v219, 2
    %v246 = vmul.f32 %v242, %v244
    %v247 = vmul.f32 %v242, %v245
    %v248 = vadd.f32 %v238, %v246
    %v249 = vadd.f32 %v239, %v247
    %250 = vset.pattern.permute.xlu0 15
    %251 = vperm.xlu0 %250, %v42
    %v252 = vpop.permute.xlu0 %251
    %v254 = vperm.slane %v218, 3
    %v255 = vperm.slane %v219, 3
    %v256 = vmul.f32 %v252, %v254
    %v257 = vmul.f32 %v252, %v255
    %v258 = vadd.f32 %v248, %v256
    %v259 = vadd.f32 %v249, %v257
    %260 = vst [vmem:[#allocation1] ss:$2 sm:$0xff] %v43
    %v261 = vld.sshfl [vmem:[#allocation1] sm:$0xff pattern:$0x75316420]
    %v262 = vld.sshfl [vmem:[#allocation1 + $0x8] sm:$0xff pattern:$0x75316420]
    %265 = vrot.lane.b32.xlu0 %v261, 111
    %v266 = vpop.permute.xlu0 %265
    %267 = vrot.lane.b32.xlu0 %v262, 111
    %v268 = vpop.permute.xlu0 %267
    %vm269 = vcmp.lt.s32.totalorder %v112, 111
    %v270 = vsel %vm269, %v266, %v268
    %v271 = vsel %vm269, %v268, %v266
    %272 = vset.pattern.permute.xlu0 16
    %273 = vperm.xlu0 %272, %v42
    %v274 = vpop.permute.xlu0 %273
    %v276 = vperm.slane %v270, 0
    %v277 = vperm.slane %v271, 0
    %v278 = vmul.f32 %v274, %v276
    %v279 = vmul.f32 %v274, %v277
    %v280 = vadd.f32 %v258, %v278
    %v281 = vadd.f32 %v259, %v279
    %282 = vset.pattern.permute.xlu0 17
    %283 = vperm.xlu0 %282, %v42
    %v284 = vpop.permute.xlu0 %283
    %v286 = vperm.slane %v270, 1
    %v287 = vperm.slane %v271, 1
    %v288 = vmul.f32 %v284, %v286
    %v289 = vmul.f32 %v284, %v287
    %v290 = vadd.f32 %v280, %v288
    %v291 = vadd.f32 %v281, %v289
    %292 = vset.pattern.permute.xlu0 18
    %293 = vperm.xlu0 %292, %v42
    %v294 = vpop.permute.xlu0 %293
    %v296 = vperm.slane %v270, 2
    %v297 = vperm.slane %v271, 2
    %v298 = vmul.f32 %v294, %v296
    %v299 = vmul.f32 %v294, %v297
    %v300 = vadd.f32 %v290, %v298
    %v301 = vadd.f32 %v291, %v299
    %302 = vset.pattern.permute.xlu0 19
    %303 = vperm.xlu0 %302, %v42
    %v304 = vpop.permute.xlu0 %303
    %v306 = vperm.slane %v270, 3
    %v307 = vperm.slane %v271, 3
    %v308 = vmul.f32 %v304, %v306
    %v309 = vmul.f32 %v304, %v307
    %v310 = vadd.f32 %v300, %v308
    %v311 = vadd.f32 %v301, %v309
    %312 = vst [vmem:[#allocation1] ss:$2 sm:$0xff] %v43
    %v313 = vld.sshfl [vmem:[#allocation1] sm:$0xff pattern:$0x75316420]
    %v314 = vld.sshfl [vmem:[#allocation1 + $0x8] sm:$0xff pattern:$0x75316420]
    %317 = vrot.lane.b32.xlu0 %v313, 110
    %v318 = vpop.permute.xlu0 %317
    %319 = vrot.lane.b32.xlu0 %v314, 110
    %v320 = vpop.permute.xlu0 %319
    %vm321 = vcmp.lt.s32.totalorder %v112, 110
    %v322 = vsel %vm321, %v318, %v320
    %v323 = vsel %vm321, %v320, %v318
    %324 = vset.pattern.permute.xlu0 20
    %325 = vperm.xlu0 %324, %v42
    %v326 = vpop.permute.xlu0 %325
    %v328 = vperm.slane %v322, 0
    %v329 = vperm.slane %v323, 0
    %v330 = vmul.f32 %v326, %v328
    %v331 = vmul.f32 %v326, %v329
    %v332 = vadd.f32 %v310, %v330
    %v333 = vadd.f32 %v311, %v331
    %334 = vset.pattern.permute.xlu0 21
    %335 = vperm.xlu0 %334, %v42
    %v336 = vpop.permute.xlu0 %335
    %v338 = vperm.slane %v322, 1
    %v339 = vperm.slane %v323, 1
    %v340 = vmul.f32 %v336, %v338
    %v341 = vmul.f32 %v336, %v339
    %v342 = vadd.f32 %v332, %v340
    %v343 = vadd.f32 %v333, %v341
    %344 = vset.pattern.permute.xlu0 22
    %345 = vperm.xlu0 %344, %v42
    %v346 = vpop.permute.xlu0 %345
    %v348 = vperm.slane %v322, 2
    %v349 = vperm.slane %v323, 2
    %v350 = vmul.f32 %v346, %v348
    %v351 = vmul.f32 %v346, %v349
    %v352 = vadd.f32 %v342, %v350
    %v353 = vadd.f32 %v343, %v351
    %354 = vset.pattern.permute.xlu0 23
    %355 = vperm.xlu0 %354, %v42
    %v356 = vpop.permute.xlu0 %355
    %v358 = vperm.slane %v322, 3
    %v359 = vperm.slane %v323, 3
    %v360 = vmul.f32 %v356, %v358
    %v361 = vmul.f32 %v356, %v359
    %v362 = vadd.f32 %v352, %v360
    %v363 = vadd.f32 %v353, %v361
    %364 = vst [vmem:[#allocation1] ss:$2 sm:$0xff] %v43
    %v365 = vld.sshfl [vmem:[#allocation1] sm:$0xff pattern:$0x75316420]
    %v366 = vld.sshfl [vmem:[#allocation1 + $0x8] sm:$0xff pattern:$0x75316420]
    %369 = vrot.lane.b32.xlu0 %v365, 96
    %v370 = vpop.permute.xlu0 %369
    %371 = vrot.lane.b32.xlu0 %v366, 96
    %v372 = vpop.permute.xlu0 %371
    %vm373 = vcmp.lt.s32.totalorder %v112, 96
    %v374 = vsel %vm373, %v370, %v372
    %v375 = vsel %vm373, %v372, %v370
    %376 = vset.pattern.permute.xlu0 24
    %377 = vperm.xlu0 %376, %v42
    %v378 = vpop.permute.xlu0 %377
    %v380 = vperm.slane %v374, 0
    %v381 = vperm.slane %v375, 0
    %v382 = vmul.f32 %v378, %v380
    %v383 = vmul.f32 %v378, %v381
    %v384 = vadd.f32 %v362, %v382
    %v385 = vadd.f32 %v363, %v383
    %386 = vset.pattern.permute.xlu0 25
    %387 = vperm.xlu0 %386, %v42
    %v388 = vpop.permute.xlu0 %387
    %v390 = vperm.slane %v374, 1
    %v391 = vperm.slane %v375, 1
    %v392 = vmul.f32 %v388, %v390
    %v393 = vmul.f32 %v388, %v391
    %v394 = vadd.f32 %v384, %v392
    %v395 = vadd.f32 %v385, %v393
    %396 = vset.pattern.permute.xlu0 26
    %397 = vperm.xlu0 %396, %v42
    %v398 = vpop.permute.xlu0 %397
    %v400 = vperm.slane %v374, 2
    %v401 = vperm.slane %v375, 2
    %v402 = vmul.f32 %v398, %v400
    %v403 = vmul.f32 %v398, %v401
    %v404 = vadd.f32 %v394, %v402
    %v405 = vadd.f32 %v395, %v403
    %406 = vset.pattern.permute.xlu0 27
    %407 = vperm.xlu0 %406, %v42
    %v408 = vpop.permute.xlu0 %407
    %v410 = vperm.slane %v374, 3
    %v411 = vperm.slane %v375, 3
    %v412 = vmul.f32 %v408, %v410
    %v413 = vmul.f32 %v408, %v411
    %v414 = vadd.f32 %v404, %v412
    %v415 = vadd.f32 %v405, %v413
    %416 = vst [vmem:[#allocation1] ss:$2 sm:$0xff] %v43
    %v417 = vld.sshfl [vmem:[#allocation1] sm:$0xff pattern:$0x75316420]
    %v418 = vld.sshfl [vmem:[#allocation1 + $0x8] sm:$0xff pattern:$0x75316420]
    %421 = vrot.lane.b32.xlu0 %v417, 95
    %v422 = vpop.permute.xlu0 %421
    %423 = vrot.lane.b32.xlu0 %v418, 95
    %v424 = vpop.permute.xlu0 %423
    %vm425 = vcmp.lt.s32.totalorder %v112, 95
    %v426 = vsel %vm425, %v422, %v424
    %v427 = vsel %vm425, %v424, %v422
    %428 = vset.pattern.permute.xlu0 28
    %429 = vperm.xlu0 %428, %v42
    %v430 = vpop.permute.xlu0 %429
    %v432 = vperm.slane %v426, 0
    %v433 = vperm.slane %v427, 0
    %v434 = vmul.f32 %v430, %v432
    %v435 = vmul.f32 %v430, %v433
    %v436 = vadd.f32 %v414, %v434
    %v437 = vadd.f32 %v415, %v435
    %438 = vset.pattern.permute.xlu0 29
    %439 = vperm.xlu0 %438, %v42
    %v440 = vpop.permute.xlu0 %439
    %v442 = vperm.slane %v426, 1
    %v443 = vperm.slane %v427, 1
    %v444 = vmul.f32 %v440, %v442
    %v445 = vmul.f32 %v440, %v443
    %v446 = vadd.f32 %v436, %v444
    %v447 = vadd.f32 %v437, %v445
    %448 = vset.pattern.permute.xlu0 30
    %449 = vperm.xlu0 %448, %v42
    %v450 = vpop.permute.xlu0 %449
    %v452 = vperm.slane %v426, 2
    %v453 = vperm.slane %v427, 2
    %v454 = vmul.f32 %v450, %v452
    %v455 = vmul.f32 %v450, %v453
    %v456 = vadd.f32 %v446, %v454
    %v457 = vadd.f32 %v447, %v455
    %458 = vset.pattern.permute.xlu0 31
    %459 = vperm.xlu0 %458, %v42
    %v460 = vpop.permute.xlu0 %459
    %v462 = vperm.slane %v426, 3
    %v463 = vperm.slane %v427, 3
    %v464 = vmul.f32 %v460, %v462
    %v465 = vmul.f32 %v460, %v463
    %v466 = vadd.f32 %v456, %v464
    %v467 = vadd.f32 %v457, %v465
    %468 = vst [vmem:[#allocation1] ss:$2 sm:$0xff] %v43
    %v469 = vld.sshfl [vmem:[#allocation1] sm:$0xff pattern:$0x75316420]
    %v470 = vld.sshfl [vmem:[#allocation1 + $0x8] sm:$0xff pattern:$0x75316420]
    %473 = vrot.lane.b32.xlu0 %v469, 94
    %v474 = vpop.permute.xlu0 %473
    %475 = vrot.lane.b32.xlu0 %v470, 94
    %v476 = vpop.permute.xlu0 %475
    %vm477 = vcmp.lt.s32.totalorder %v112, 94
    %v478 = vsel %vm477, %v474, %v476
    %v479 = vsel %vm477, %v476, %v474
    %480 = vset.pattern.permute.xlu0 32
    %481 = vperm.xlu0 %480, %v42
    %v482 = vpop.permute.xlu0 %481
    %v484 = vperm.slane %v478, 0
    %v485 = vperm.slane %v479, 0
    %v486 = vmul.f32 %v482, %v484
    %v487 = vmul.f32 %v482, %v485
    %v488 = vadd.f32 %v466, %v486
    %v489 = vadd.f32 %v467, %v487
    %490 = vset.pattern.permute.xlu0 33
    %491 = vperm.xlu0 %490, %v42
    %v492 = vpop.permute.xlu0 %491
    %v494 = vperm.slane %v478, 1
    %v495 = vperm.slane %v479, 1
    %v496 = vmul.f32 %v492, %v494
    %v497 = vmul.f32 %v492, %v495
    %v498 = vadd.f32 %v488, %v496
    %v499 = vadd.f32 %v489, %v497
    %500 = vset.pattern.permute.xlu0 34
    %501 = vperm.xlu0 %500, %v42
    %v502 = vpop.permute.xlu0 %501
    %v504 = vperm.slane %v478, 2
    %v505 = vperm.slane %v479, 2
    %v506 = vmul.f32 %v502, %v504
    %v507 = vmul.f32 %v502, %v505
    %v508 = vadd.f32 %v498, %v506
    %v509 = vadd.f32 %v499, %v507
    %510 = vset.pattern.permute.xlu0 35
    %511 = vperm.xlu0 %510, %v42
    %v512 = vpop.permute.xlu0 %511
    %v514 = vperm.slane %v478, 3
    %v515 = vperm.slane %v479, 3
    %v516 = vmul.f32 %v512, %v514
    %v517 = vmul.f32 %v512, %v515
    %v518 = vadd.f32 %v508, %v516
    %v519 = vadd.f32 %v509, %v517
    %520 = vst [vmem:[#allocation7] sm:$0xff] %v518
    %521 = vst [vmem:[#allocation7 + $0x8] sm:$0xff] %v519
    %s522 = scalar_lea.vmem [#allocation2], 8
    %v523 = vld [vmem:[%s522] sm:$0xff]
    %v525 = vperm.slane %v523, 0
    %v526 = vperm.slane %v523, 4
    %v529 = vperm.slane %v525, 0
    %v530 = vperm.slane %v526, 0
    %v531 = vmul.f32 %v47, %v529
    %v532 = vmul.f32 %v47, %v530
    %v533 = vadd.f32 %v531, 0.0
    %v534 = vadd.f32 %v532, 0.0
    %v535 = vperm.slane %v523, 1
    %v536 = vperm.slane %v523, 5
    %v539 = vperm.slane %v535, 1
    %v540 = vperm.slane %v536, 1
    %v541 = vmul.f32 %v62, %v539
    %v542 = vmul.f32 %v62, %v540
    %v543 = vadd.f32 %v533, %v541
    %v544 = vadd.f32 %v534, %v542
    %v545 = vperm.slane %v523, 2
    %v546 = vperm.slane %v523, 6
    %v549 = vperm.slane %v545, 2
    %v550 = vperm.slane %v546, 2
    %v551 = vmul.f32 %v76, %v549
    %v552 = vmul.f32 %v76, %v550
    %v553 = vadd.f32 %v543, %v551
    %v554 = vadd.f32 %v544, %v552
    %v555 = vperm.slane %v523, 3
    %v556 = vperm.slane %v523, 7
    %v559 = vperm.slane %v555, 3
    %v560 = vperm.slane %v556, 3
    %v561 = vmul.f32 %v90, %v559
    %v562 = vmul.f32 %v90, %v560
    %v563 = vadd.f32 %v553, %v561
    %v564 = vadd.f32 %v554, %v562
    %565 = vst [vmem:[#allocation1] ss:$2 sm:$0xff] %v523
    %v566 = vld.sshfl [vmem:[#allocation1] sm:$0xff pattern:$0x75316420]
    %v567 = vld.sshfl [vmem:[#allocation1 + $0x8] sm:$0xff pattern:$0x75316420]
    %570 = vrot.lane.b32.xlu0 %v566, 127
    %v571 = vpop.permute.xlu0 %570
    %572 = vrot.lane.b32.xlu0 %v567, 127
    %v573 = vpop.permute.xlu0 %572
    %v574 = vsel %vm113, %v571, %v573
    %v575 = vsel %vm113, %v573, %v571
    %v576 = vperm.slane %v574, 0
    %v577 = vperm.slane %v575, 0
    %v578 = vmul.f32 %v118, %v576
    %v579 = vmul.f32 %v118, %v577
    %v580 = vadd.f32 %v563, %v578
    %v581 = vadd.f32 %v564, %v579
    %v582 = vperm.slane %v574, 1
    %v583 = vperm.slane %v575, 1
    %v584 = vmul.f32 %v128, %v582
    %v585 = vmul.f32 %v128, %v583
    %v586 = vadd.f32 %v580, %v584
    %v587 = vadd.f32 %v581, %v585
    %v588 = vperm.slane %v574, 2
    %v589 = vperm.slane %v575, 2
    %v590 = vmul.f32 %v138, %v588
    %v591 = vmul.f32 %v138, %v589
    %v592 = vadd.f32 %v586, %v590
    %v593 = vadd.f32 %v587, %v591
    %v594 = vperm.slane %v574, 3
    %v595 = vperm.slane %v575, 3
    %v596 = vmul.f32 %v148, %v594
    %v597 = vmul.f32 %v148, %v595
    %v598 = vadd.f32 %v592, %v596
    %v599 = vadd.f32 %v593, %v597
    %600 = vst [vmem:[#allocation1] ss:$2 sm:$0xff] %v523
    %v601 = vld.sshfl [vmem:[#allocation1] sm:$0xff pattern:$0x75316420]
    %v602 = vld.sshfl [vmem:[#allocation1 + $0x8] sm:$0xff pattern:$0x75316420]
    %605 = vrot.lane.b32.xlu0 %v601, 126
    %v606 = vpop.permute.xlu0 %605
    %607 = vrot.lane.b32.xlu0 %v602, 126
    %v608 = vpop.permute.xlu0 %607
    %v609 = vsel %vm165, %v606, %v608
    %v610 = vsel %vm165, %v608, %v606
    %v611 = vperm.slane %v609, 0
    %v612 = vperm.slane %v610, 0
    %v613 = vmul.f32 %v170, %v611
    %v614 = vmul.f32 %v170, %v612
    %v615 = vadd.f32 %v598, %v613
    %v616 = vadd.f32 %v599, %v614
    %v617 = vperm.slane %v609, 1
    %v618 = vperm.slane %v610, 1
    %v619 = vmul.f32 %v180, %v617
    %v620 = vmul.f32 %v180, %v618
    %v621 = vadd.f32 %v615, %v619
    %v622 = vadd.f32 %v616, %v620
    %v623 = vperm.slane %v609, 2
    %v624 = vperm.slane %v610, 2
    %v625 = vmul.f32 %v190, %v623
    %v626 = vmul.f32 %v190, %v624
    %v627 = vadd.f32 %v621, %v625
    %v628 = vadd.f32 %v622, %v626
    %v629 = vperm.slane %v609, 3
    %v630 = vperm.slane %v610, 3
    %v631 = vmul.f32 %v200, %v629
    %v632 = vmul.f32 %v200, %v630
    %v633 = vadd.f32 %v627, %v631
    %v634 = vadd.f32 %v628, %v632
    %635 = vst [vmem:[#allocation1] ss:$2 sm:$0xff] %v523
    %v636 = vld.sshfl [vmem:[#allocation1] sm:$0xff pattern:$0x75316420]
    %v637 = vld.sshfl [vmem:[#allocation1 + $0x8] sm:$0xff pattern:$0x75316420]
    %640 = vrot.lane.b32.xlu0 %v636, 112
    %v641 = vpop.permute.xlu0 %640
    %642 = vrot.lane.b32.xlu0 %v637, 112
    %v643 = vpop.permute.xlu0 %642
    %v644 = vsel %vm217, %v641, %v643
    %v645 = vsel %vm217, %v643, %v641
    %v646 = vperm.slane %v644, 0
    %v647 = vperm.slane %v645, 0
    %v648 = vmul.f32 %v222, %v646
    %v649 = vmul.f32 %v222, %v647
    %v650 = vadd.f32 %v633, %v648
    %v651 = vadd.f32 %v634, %v649
    %v652 = vperm.slane %v644, 1
    %v653 = vperm.slane %v645, 1
    %v654 = vmul.f32 %v232, %v652
    %v655 = vmul.f32 %v232, %v653
    %v656 = vadd.f32 %v650, %v654
    %v657 = vadd.f32 %v651, %v655
    %v658 = vperm.slane %v644, 2
    %v659 = vperm.slane %v645, 2
    %v660 = vmul.f32 %v242, %v658
    %v661 = vmul.f32 %v242, %v659
    %v662 = vadd.f32 %v656, %v660
    %v663 = vadd.f32 %v657, %v661
    %v664 = vperm.slane %v644, 3
    %v665 = vperm.slane %v645, 3
    %v666 = vmul.f32 %v252, %v664
    %v667 = vmul.f32 %v252, %v665
    %v668 = vadd.f32 %v662, %v666
    %v669 = vadd.f32 %v663, %v667
    %670 = vst [vmem:[#allocation1] ss:$2 sm:$0xff] %v523
    %v671 = vld.sshfl [vmem:[#allocation1] sm:$0xff pattern:$0x75316420]
    %v672 = vld.sshfl [vmem:[#allocation1 + $0x8] sm:$0xff pattern:$0x75316420]
    %675 = vrot.lane.b32.xlu0 %v671, 111
    %v676 = vpop.permute.xlu0 %675
    %677 = vrot.lane.b32.xlu0 %v672, 111
    %v678 = vpop.permute.xlu0 %677
    %v679 = vsel %vm269, %v676, %v678
    %v680 = vsel %vm269, %v678, %v676
    %v681 = vperm.slane %v679, 0
    %v682 = vperm.slane %v680, 0
    %v683 = vmul.f32 %v274, %v681
    %v684 = vmul.f32 %v274, %v682
    %v685 = vadd.f32 %v668, %v683
    %v686 = vadd.f32 %v669, %v684
    %v687 = vperm.slane %v679, 1
    %v688 = vperm.slane %v680, 1
    %v689 = vmul.f32 %v284, %v687
    %v690 = vmul.f32 %v284, %v688
    %v691 = vadd.f32 %v685, %v689
    %v692 = vadd.f32 %v686, %v690
    %v693 = vperm.slane %v679, 2
    %v694 = vperm.slane %v680, 2
    %v695 = vmul.f32 %v294, %v693
    %v696 = vmul.f32 %v294, %v694
    %v697 = vadd.f32 %v691, %v695
    %v698 = vadd.f32 %v692, %v696
    %v699 = vperm.slane %v679, 3
    %v700 = vperm.slane %v680, 3
    %v701 = vmul.f32 %v304, %v699
    %v702 = vmul.f32 %v304, %v700
    %v703 = vadd.f32 %v697, %v701
    %v704 = vadd.f32 %v698, %v702
    %705 = vst [vmem:[#allocation1] ss:$2 sm:$0xff] %v523
    %v706 = vld.sshfl [vmem:[#allocation1] sm:$0xff pattern:$0x75316420]
    %v707 = vld.sshfl [vmem:[#allocation1 + $0x8] sm:$0xff pattern:$0x75316420]
    %710 = vrot.lane.b32.xlu0 %v706, 110
    %v711 = vpop.permute.xlu0 %710
    %712 = vrot.lane.b32.xlu0 %v707, 110
    %v713 = vpop.permute.xlu0 %712
    %v714 = vsel %vm321, %v711, %v713
    %v715 = vsel %vm321, %v713, %v711
    %v716 = vperm.slane %v714, 0
    %v717 = vperm.slane %v715, 0
    %v718 = vmul.f32 %v326, %v716
    %v719 = vmul.f32 %v326, %v717
    %v720 = vadd.f32 %v703, %v718
    %v721 = vadd.f32 %v704, %v719
    %v722 = vperm.slane %v714, 1
    %v723 = vperm.slane %v715, 1
    %v724 = vmul.f32 %v336, %v722
    %v725 = vmul.f32 %v336, %v723
    %v726 = vadd.f32 %v720, %v724
    %v727 = vadd.f32 %v721, %v725
    %v728 = vperm.slane %v714, 2
    %v729 = vperm.slane %v715, 2
    %v730 = vmul.f32 %v346, %v728
    %v731 = vmul.f32 %v346, %v729
    %v732 = vadd.f32 %v726, %v730
    %v733 = vadd.f32 %v727, %v731
    %v734 = vperm.slane %v714, 3
    %v735 = vperm.slane %v715, 3
    %v736 = vmul.f32 %v356, %v734
    %v737 = vmul.f32 %v356, %v735
    %v738 = vadd.f32 %v732, %v736
    %v739 = vadd.f32 %v733, %v737
    %740 = vst [vmem:[#allocation1] ss:$2 sm:$0xff] %v523
    %v741 = vld.sshfl [vmem:[#allocation1] sm:$0xff pattern:$0x75316420]
    %v742 = vld.sshfl [vmem:[#allocation1 + $0x8] sm:$0xff pattern:$0x75316420]
    %745 = vrot.lane.b32.xlu0 %v741, 96
    %v746 = vpop.permute.xlu0 %745
    %747 = vrot.lane.b32.xlu0 %v742, 96
    %v748 = vpop.permute.xlu0 %747
    %v749 = vsel %vm373, %v746, %v748
    %v750 = vsel %vm373, %v748, %v746
    %v751 = vperm.slane %v749, 0
    %v752 = vperm.slane %v750, 0
    %v753 = vmul.f32 %v378, %v751
    %v754 = vmul.f32 %v378, %v752
    %v755 = vadd.f32 %v738, %v753
    %v756 = vadd.f32 %v739, %v754
    %v757 = vperm.slane %v749, 1
    %v758 = vperm.slane %v750, 1
    %v759 = vmul.f32 %v388, %v757
    %v760 = vmul.f32 %v388, %v758
    %v761 = vadd.f32 %v755, %v759
    %v762 = vadd.f32 %v756, %v760
    %v763 = vperm.slane %v749, 2
    %v764 = vperm.slane %v750, 2
    %v765 = vmul.f32 %v398, %v763
    %v766 = vmul.f32 %v398, %v764
    %v767 = vadd.f32 %v761, %v765
    %v768 = vadd.f32 %v762, %v766
    %v769 = vperm.slane %v749, 3
    %v770 = vperm.slane %v750, 3
    %v771 = vmul.f32 %v408, %v769
    %v772 = vmul.f32 %v408, %v770
    %v773 = vadd.f32 %v767, %v771
    %v774 = vadd.f32 %v768, %v772
    %775 = vst [vmem:[#allocation1] ss:$2 sm:$0xff] %v523
    %v776 = vld.sshfl [vmem:[#allocation1] sm:$0xff pattern:$0x75316420]
    %v777 = vld.sshfl [vmem:[#allocation1 + $0x8] sm:$0xff pattern:$0x75316420]
    %780 = vrot.lane.b32.xlu0 %v776, 95
    %v781 = vpop.permute.xlu0 %780
    %782 = vrot.lane.b32.xlu0 %v777, 95
    %v783 = vpop.permute.xlu0 %782
    %v784 = vsel %vm425, %v781, %v783
    %v785 = vsel %vm425, %v783, %v781
    %v786 = vperm.slane %v784, 0
    %v787 = vperm.slane %v785, 0
    %v788 = vmul.f32 %v430, %v786
    %v789 = vmul.f32 %v430, %v787
    %v790 = vadd.f32 %v773, %v788
    %v791 = vadd.f32 %v774, %v789
    %v792 = vperm.slane %v784, 1
    %v793 = vperm.slane %v785, 1
    %v794 = vmul.f32 %v440, %v792
    %v795 = vmul.f32 %v440, %v793
    %v796 = vadd.f32 %v790, %v794
    %v797 = vadd.f32 %v791, %v795
    %v798 = vperm.slane %v784, 2
    %v799 = vperm.slane %v785, 2
    %v800 = vmul.f32 %v450, %v798
    %v801 = vmul.f32 %v450, %v799
    %v802 = vadd.f32 %v796, %v800
    %v803 = vadd.f32 %v797, %v801
    %v804 = vperm.slane %v784, 3
    %v805 = vperm.slane %v785, 3
    %v806 = vmul.f32 %v460, %v804
    %v807 = vmul.f32 %v460, %v805
    %v808 = vadd.f32 %v802, %v806
    %v809 = vadd.f32 %v803, %v807
    %810 = vst [vmem:[#allocation1] ss:$2 sm:$0xff] %v523
    %v811 = vld.sshfl [vmem:[#allocation1] sm:$0xff pattern:$0x75316420]
    %v812 = vld.sshfl [vmem:[#allocation1 + $0x8] sm:$0xff pattern:$0x75316420]
    %815 = vrot.lane.b32.xlu0 %v811, 94
    %v816 = vpop.permute.xlu0 %815
    %817 = vrot.lane.b32.xlu0 %v812, 94
    %v818 = vpop.permute.xlu0 %817
    %v819 = vsel %vm477, %v816, %v818
    %v820 = vsel %vm477, %v818, %v816
    %v821 = vperm.slane %v819, 0
    %v822 = vperm.slane %v820, 0
    %v823 = vmul.f32 %v482, %v821
    %v824 = vmul.f32 %v482, %v822
    %v825 = vadd.f32 %v808, %v823
    %v826 = vadd.f32 %v809, %v824
    %v827 = vperm.slane %v819, 1
    %v828 = vperm.slane %v820, 1
    %v829 = vmul.f32 %v492, %v827
    %v830 = vmul.f32 %v492, %v828
    %v831 = vadd.f32 %v825, %v829
    %v832 = vadd.f32 %v826, %v830
    %v833 = vperm.slane %v819, 2
    %v834 = vperm.slane %v820, 2
    %v835 = vmul.f32 %v502, %v833
    %v836 = vmul.f32 %v502, %v834
    %v837 = vadd.f32 %v831, %v835
    %v838 = vadd.f32 %v832, %v836
    %v839 = vperm.slane %v819, 3
    %v840 = vperm.slane %v820, 3
    %v841 = vmul.f32 %v512, %v839
    %v842 = vmul.f32 %v512, %v840
    %v843 = vadd.f32 %v837, %v841
    %v844 = vadd.f32 %v838, %v842
    %s845 = scalar_lea.vmem [#allocation7], 16
    %846 = vst [vmem:[%s845] sm:$0xff] %v843
    %847 = vst [vmem:[%s845 + $0x8] sm:$0xff] %v844
    // Predicated region
    $region18: #{tpu_custom_call.1} parent=1 // pred_check
      _
    $region19: #{tpu_custom_call.1} parent=1 // pred_check_branch
      %849 = sbr.rel (0) target = $region21
    $region20: #{tpu_custom_call.1} parent=1 // pred_region
      %851 = vsyncadd [#allocation4], 0
      %s852 = sshll.u32 [#allocation7], 4
      %s853 = int_to_ptr.vmem [resolvable:$true] %s852
      %s854 = sshll.u32 %s2, 4
      %s855 = int_to_ptr.hbm [resolvable:$true] %s854
      %860 = dma.vmem_to_hbm [thread:$0]  %s853, 512, %s855, [#allocation4], 256, 256, 16
    $region21: #{tpu_custom_call.1} parent=1 // pred_fallthru
      _
    // Predicated region
    $region22: #{tpu_custom_call.1} parent=1 // pred_check
      _
    $region23: #{tpu_custom_call.1} parent=1 // pred_check_branch
      %862 = sbr.rel (0) target = $region25
    $region24: #{tpu_custom_call.1} parent=1 // pred_region
      %864 = dma.done [#allocation4], 512
    $region25: #{tpu_custom_call.1} parent=1 // pred_fallthru
      _
    %865 = vsyncpa [#allocation3], 1
    %866 = vsyncpa [#allocation6], 1
    %867 = vsyncpa [#allocation4], 1

</llo_original>
